<compile_context>
chip_gen: v7x
topology: tpu7x:2x2x1
jax: 0.10.0
libtpu: 0.0.40
codegen_flags: <defaults>
</compile_context>

<pallas_src>
import functools
import math

import jax
import jax.numpy as jnp
from jax import lax
from jax.experimental import pallas as pl
from jax.experimental.pallas import tpu as pltpu


NEG_INF = -1e30


def _attn_kernel(x_ref, wqkv_ref, bqkv_ref, wproj_ref, bproj_ref,
                 o_ref, acc_ref, bias_ref):
    """One (batch, head) grid step.

    x_ref     : (1, T, C)     bf16  activations (resident across heads)
    wqkv_ref  : (1, C, 3*hd)  bf16  this head's Q/K/V projection columns
    bqkv_ref  : (1, 1, 3*hd)  f32   this head's Q/K/V bias
    wproj_ref : (1, hd, C)    bf16  this head's rows of W_proj
    bproj_ref : (1, C)        f32   output-projection bias
    o_ref     : (1, T, C)     f32   output block (resident across heads)
    acc_ref   : (T, C)        f32   output-projection accumulator (scratch)
    bias_ref  : (T, T)        f32   additive causal mask (scratch)
    """
    h = pl.program_id(1)
    n_head = pl.num_programs(1)
    T = x_ref.shape[1]
    hd = wproj_ref.shape[1]
    scale = 1.0 / math.sqrt(hd)

    @pl.when(h == 0)
    def _init():
        acc_ref[...] = jnp.zeros_like(acc_ref)
        row = lax.broadcasted_iota(jnp.int32, (T, T), 0)
        col = lax.broadcasted_iota(jnp.int32, (T, T), 1)
        bias_ref[...] = jnp.where(row >= col, 0.0, NEG_INF).astype(jnp.float32)

    x = x_ref[0]                                    # (T, C) bf16

    # Per-head QKV projection: (T, C) @ (C, 3*hd), bf16 in / f32 accumulate.
    qkv = jnp.dot(x, wqkv_ref[0], preferred_element_type=jnp.float32)
    qkv = qkv + bqkv_ref[0]                         # (T, 3*hd) f32

    # Fold the 1/sqrt(hd) scale into q (T*hd muls instead of T*T).
    q = (qkv[:, 0 * hd:1 * hd] * scale).astype(jnp.bfloat16)
    k = qkv[:, 1 * hd:2 * hd].astype(jnp.bfloat16)
    v = qkv[:, 2 * hd:3 * hd].astype(jnp.bfloat16)

    # Scores: q @ k^T on the MXU, plus additive causal bias.
    scores = lax.dot_general(q, k, (((1,), (1,)), ((), ())),
                             preferred_element_type=jnp.float32)  # (T, T)
    scores = scores + bias_ref[...]

    # Numerically stable softmax, kept in f32; reciprocal on the EUP.
    m = scores.max(axis=-1, keepdims=True)
    p = jnp.exp(scores - m)
    probs = p * pl.reciprocal(p.sum(axis=-1, keepdims=True), approx=True)

    # Weighted values and this head's slice of the output projection.
    y = jnp.dot(probs.astype(jnp.bfloat16), v,
                preferred_element_type=jnp.float32)               # (T, hd)
    acc_ref[...] += jnp.dot(y.astype(jnp.bfloat16), wproj_ref[0],
                            preferred_element_type=jnp.float32)   # (T, C)

    @pl.when(h == n_head - 1)
    def _finalize():
        o_ref[0] = (acc_ref[...] + bproj_ref[...]).astype(o_ref.dtype)


def causal_self_attention(x, w_qkv, b_qkv, w_proj, b_proj, *, n_head):
    """x: (B, T, C) f32; weights stored as (in, out) so y = x @ W + b."""
    B, T, C = x.shape
    assert C % n_head == 0
    hd = C // n_head

    # ---- host-side layout plumbing (runs under jit, once per call) ----------
    # Per-head QKV weight panel: (n_head, C, 3*hd) with columns [q | k | v].
    w_qkv_h = (w_qkv.reshape(C, 3, n_head, hd)
               .transpose(2, 0, 1, 3)
               .reshape(n_head, C, 3 * hd)
               .astype(jnp.bfloat16))
    b_qkv_h = (b_qkv.reshape(3, n_head, hd)
               .transpose(1, 0, 2)
               .reshape(n_head, 1, 3 * hd)
               .astype(jnp.float32))
    # Per-head rows of W_proj: out = sum_h y_h @ W_proj[h*hd:(h+1)*hd, :].
    w_proj_h = w_proj.reshape(n_head, hd, C).astype(jnp.bfloat16)
    b_proj2 = b_proj.reshape(1, C).astype(jnp.float32)
    x_bf = x.astype(jnp.bfloat16)

    # ---- advisory cost estimate ---------------------------------------------
    flops = (2 * B * T * C * (3 * C)              # QKV projection
             + 4 * B * n_head * T * T * hd        # QK^T and P@V
             + 2 * B * T * C * C)                 # output projection
    transcendentals = B * n_head * T * T          # exp in softmax
    bytes_accessed = (x_bf.size * 2 + w_qkv_h.size * 2 + b_qkv_h.size * 4
                      + w_proj_h.size * 2 + b_proj2.size * 4 + B * T * C * 4)
    cost = pl.CostEstimate(flops=flops, transcendentals=transcendentals,
                           bytes_accessed=bytes_accessed)

    # ---- explicit VMEM budget (double-buffered blocks + scratch + temps) ----
    vmem_bytes = (2 * T * C * 2                     # x block, bf16, 2 buffers
                  + 2 * T * C * 4                   # out block, f32, 2 buffers
                  + 2 * (C * 3 * hd * 2 + 3 * hd * 4 + hd * C * 2 + C * 4)
                  + T * C * 4                       # accumulator scratch
                  + T * T * 4                       # causal-bias scratch
                  + 6 * T * T * 4)                  # scores/softmax temporaries
    vmem_limit = int(min(max(2 * vmem_bytes, 16 * 1024 * 1024),
                         48 * 1024 * 1024))

    return pl.pallas_call(
        _attn_kernel,
        out_shape=jax.ShapeDtypeStruct((B, T, C), x.dtype),
        grid_spec=pltpu.PrefetchScalarGridSpec(
            num_scalar_prefetch=0,
            grid=(B, n_head),
            in_specs=[
                pl.BlockSpec((1, T, C), lambda b, h: (b, 0, 0)),        # x
                pl.BlockSpec((1, C, 3 * hd), lambda b, h: (h, 0, 0)),   # W_qkv[h]
                pl.BlockSpec((1, 1, 3 * hd), lambda b, h: (h, 0, 0)),   # b_qkv[h]
                pl.BlockSpec((1, hd, C), lambda b, h: (h, 0, 0)),       # W_proj[h]
                pl.BlockSpec((1, C), lambda b, h: (0, 0)),              # b_proj
            ],
            out_specs=pl.BlockSpec((1, T, C), lambda b, h: (b, 0, 0)),
            scratch_shapes=[
                pltpu.VMEM((T, C), jnp.float32),   # output-projection accumulator
                pltpu.VMEM((T, T), jnp.float32),   # additive causal mask
            ],
        ),
        compiler_params=pltpu.CompilerParams(
            dimension_semantics=("parallel", "arbitrary"),
            vmem_limit_bytes=vmem_limit),
        cost_estimate=cost,
    )(x_bf, w_qkv_h, b_qkv_h, w_proj_h, b_proj2)
    # TODO(synk): for long sequences (T >= 1024) add a query-tile grid axis and
    # flash-style online softmax with a pl.when skip of fully-masked key tiles.


def _reference(x, w_qkv, b_qkv, w_proj, b_proj, n_head):
    """Plain-JAX f32 reference mirroring the PyTorch forward."""
    B, T, C = x.shape
    hd = C // n_head
    qkv = x @ w_qkv + b_qkv[0]
    q, k, v = jnp.split(qkv, 3, axis=-1)
    q = q.reshape(B, T, n_head, hd).transpose(0, 2, 1, 3)
    k = k.reshape(B, T, n_head, hd).transpose(0, 2, 1, 3)
    v = v.reshape(B, T, n_head, hd).transpose(0, 2, 1, 3)
    scores = jnp.einsum('bhqd,bhkd->bhqk', q, k) / math.sqrt(hd)
    mask = jnp.tril(jnp.ones((T, T), dtype=bool))
    scores = jnp.where(mask[None, None], scores, -1e30)
    probs = jax.nn.softmax(scores, axis=-1)
    y = jnp.einsum('bhqk,bhkd->bhqd', probs, v)
    y = y.transpose(0, 2, 1, 3).reshape(B, T, C)
    return y @ w_proj + b_proj[0]


if __name__ == "__main__":
    # Small config consistent with the module: n_embed % n_head == 0.
    B, T, C, NH = 2, 128, 128, 4

    key = jax.random.PRNGKey(0)
    kx, k1, k2, k3, k4 = jax.random.split(key, 5)

    x = jax.random.normal(kx, (B, T, C), dtype=jnp.float32)
    # Linear weight shapes from __init__: c_attn (C, 3C)+(3C,), c_proj (C, C)+(C,)
    w_qkv = jax.random.normal(k1, (C, 3 * C), dtype=jnp.float32) * 0.02
    b_qkv = jax.random.normal(k2, (1, 3 * C), dtype=jnp.float32) * 0.02
    w_proj = jax.random.normal(k3, (C, C), dtype=jnp.float32) * 0.02
    b_proj = jax.random.normal(k4, (1, C), dtype=jnp.float32) * 0.02

    fn = jax.jit(functools.partial(causal_self_attention, n_head=NH))
    out = jax.block_until_ready(fn(x, w_qkv, b_qkv, w_proj, b_proj))

    ref = _reference(x, w_qkv, b_qkv, w_proj, b_proj, NH)
    assert out.shape == (B, T, C)
    err = float(jnp.max(jnp.abs(out - ref)))
    assert err < 3e-2, f"mismatch vs reference: max abs err = {err}"

    print("KERNEL_OK")
</pallas_src>

<mosaic_0001>
module attributes {stable_mosaic.version = 11 : i64} {
  func.func @_attn_kernel(%arg0: i32, %arg1: i32, %arg2: memref<1x128x128xbf16, #tpu.memory_space<vmem>>, %arg3: memref<1x128x96xbf16, #tpu.memory_space<vmem>>, %arg4: memref<1x1x96xf32, #tpu.memory_space<vmem>>, %arg5: memref<1x32x128xbf16, #tpu.memory_space<vmem>>, %arg6: memref<1x128xf32, #tpu.memory_space<vmem>>, %arg7: memref<1x128x128xf32, #tpu.memory_space<vmem>>, %arg8: memref<128x128xf32, #tpu.memory_space<vmem>>, %arg9: memref<128x128xf32, #tpu.memory_space<vmem>>) attributes {dimension_semantics = [#tpu.dimension_semantics<parallel>, #tpu.dimension_semantics<arbitrary>], iteration_bounds = array<i64: 2, 4>, scalar_prefetch = 0 : i64, scratch_operands = 2 : i64, tpu.core_type = #tpu.core_type<tc>, window_params = [{transform_indices = @transform_0, window_bounds = array<i64: 1, 128, 128>}, {transform_indices = @transform_1, window_bounds = array<i64: 1, 128, 96>}, {transform_indices = @transform_2, window_bounds = array<i64: 1, 1, 96>}, {transform_indices = @transform_3, window_bounds = array<i64: 1, 32, 128>}, {pipeline_mode = #tpu.pipeline_mode<synchronous>, transform_indices = @transform_4, window_bounds = array<i64: 1, 128>}, {transform_indices = @transform_5, window_bounds = array<i64: 1, 128, 128>}]} {
    %c0_i32 = arith.constant 0 : i32
    %0 = arith.cmpi eq, %arg1, %c0_i32 : i32
    %1 = arith.extui %0 : i1 to i32
    %c0_i32_0 = arith.constant 0 : i32
    %2 = arith.cmpi ne, %1, %c0_i32_0 : i32
    scf.if %2 {
      %cst_25 = arith.constant 0.000000e+00 : f32
      %45 = vector.broadcast %cst_25 : f32 to vector<128x128xf32>
      %c0_26 = arith.constant 0 : index
      %c0_27 = arith.constant 0 : index
      %46 = vector.load %arg8[%c0_26, %c0_27] : memref<128x128xf32, #tpu.memory_space<vmem>>, vector<128x128xf32>
      tpu.vector_store %arg8[%c0_26, %c0_27], %45 {strides = array<i32>} : memref<128x128xf32, #tpu.memory_space<vmem>>, vector<128x128xf32>,
      %47 = tpu.iota {dimensions = array<i32: 0>} : vector<128x128xi32>
      %48 = tpu.iota {dimensions = array<i32: 1>} : vector<128x128xi32>
      %49 = arith.cmpi sge, %47, %48 : vector<128x128xi32>
      %cst_28 = arith.constant 0.000000e+00 : f32
      %cst_29 = arith.constant -1.000000e+30 : f32
      %50 = vector.broadcast %cst_28 : f32 to vector<128x128xf32>
      %51 = vector.broadcast %cst_29 : f32 to vector<128x128xf32>
      %52 = arith.select %49, %50, %51 : vector<128x128xi1>, vector<128x128xf32>
      %c0_30 = arith.constant 0 : index
      %c0_31 = arith.constant 0 : index
      %53 = vector.load %arg9[%c0_30, %c0_31] : memref<128x128xf32, #tpu.memory_space<vmem>>, vector<128x128xf32>
      tpu.vector_store %arg9[%c0_30, %c0_31], %52 {strides = array<i32>} : memref<128x128xf32, #tpu.memory_space<vmem>>, vector<128x128xf32>,
    } else {
    }
    %c0 = arith.constant 0 : index
    %c0_1 = arith.constant 0 : index
    %c0_2 = arith.constant 0 : index
    %3 = vector.load %arg2[%c0, %c0_1, %c0_2] : memref<1x128x128xbf16, #tpu.memory_space<vmem>>, vector<1x128x128xbf16>
    %4 = vector.shape_cast %3 : vector<1x128x128xbf16> to vector<128x128xbf16>
    %c0_3 = arith.constant 0 : index
    %c0_4 = arith.constant 0 : index
    %c0_5 = arith.constant 0 : index
    %5 = vector.load %arg3[%c0_3, %c0_4, %c0_5] : memref<1x128x96xbf16, #tpu.memory_space<vmem>>, vector<1x128x96xbf16>
    %6 = vector.shape_cast %5 : vector<1x128x96xbf16> to vector<128x96xbf16>
    %cst = arith.constant dense<0.000000e+00> : vector<128x96xf32>
    %7 = tpu.matmul %4, %6, %cst {dimension_numbers = #tpu.dot_dimension_numbers<[1], [0], [0], [1], [0, 0, 1, 1], [], []>} : vector<128x128xbf16>, vector<128x96xbf16>, vector<128x96xf32> -> vector<128x96xf32>
    %c0_6 = arith.constant 0 : index
    %c0_7 = arith.constant 0 : index
    %c0_8 = arith.constant 0 : index
    %8 = vector.load %arg4[%c0_6, %c0_7, %c0_8] : memref<1x1x96xf32, #tpu.memory_space<vmem>>, vector<1x1x96xf32>
    %9 = vector.shape_cast %8 : vector<1x1x96xf32> to vector<1x96xf32>
    %10 = vector.broadcast %9 : vector<1x96xf32> to vector<128x96xf32>
    %11 = arith.addf %7, %10 : vector<128x96xf32>
    %12 = vector.extract_strided_slice %11 {offsets = [0, 0], sizes = [128, 32], strides = [1, 1]} : vector<128x96xf32> to vector<128x32xf32>
    %cst_9 = arith.constant 0.176776692 : f32
    %13 = vector.broadcast %cst_9 : f32 to vector<128x32xf32>
    %14 = arith.mulf %12, %13 : vector<128x32xf32>
    %15 = arith.truncf %14 : vector<128x32xf32> to vector<128x32xbf16>
    %16 = vector.extract_strided_slice %11 {offsets = [0, 32], sizes = [128, 32], strides = [1, 1]} : vector<128x96xf32> to vector<128x32xf32>
    %17 = arith.truncf %16 : vector<128x32xf32> to vector<128x32xbf16>
    %18 = vector.extract_strided_slice %11 {offsets = [0, 64], sizes = [128, 32], strides = [1, 1]} : vector<128x96xf32> to vector<128x32xf32>
    %19 = arith.truncf %18 : vector<128x32xf32> to vector<128x32xbf16>
    %cst_10 = arith.constant dense<0.000000e+00> : vector<128x128xf32>
    %20 = tpu.matmul %15, %17, %cst_10 {dimension_numbers = #tpu.dot_dimension_numbers<[1], [1], [0], [0], [0, 0, 1, 0], [], []>} : vector<128x32xbf16>, vector<128x32xbf16>, vector<128x128xf32> -> vector<128x128xf32>
    %c0_11 = arith.constant 0 : index
    %c0_12 = arith.constant 0 : index
    %21 = vector.load %arg9[%c0_11, %c0_12] : memref<128x128xf32, #tpu.memory_space<vmem>>, vector<128x128xf32>
    %22 = arith.addf %20, %21 : vector<128x128xf32>
    %cst_13 = arith.constant dense<0xFF800000> : vector<128xf32>
    %23 = vector.multi_reduction <maximumf>, %22, %cst_13 [1] : vector<128x128xf32> to vector<128xf32>
    %24 = vector.shape_cast %23 : vector<128xf32> to vector<128x1xf32>
    %25 = vector.broadcast %24 : vector<128x1xf32> to vector<128x128xf32>
    %26 = arith.subf %22, %25 : vector<128x128xf32>
    %27 = math.exp %26 : vector<128x128xf32>
    %cst_14 = arith.constant dense<0.000000e+00> : vector<128xf32>
    %28 = vector.multi_reduction <add>, %27, %cst_14 [1] : vector<128x128xf32> to vector<128xf32>
    %29 = vector.shape_cast %28 : vector<128xf32> to vector<128x1xf32>
    %30 = tpu.reciprocal %29 {approx = true} : vector<128x1xf32> -> vector<128x1xf32>
    %31 = vector.broadcast %30 : vector<128x1xf32> to vector<128x128xf32>
    %32 = arith.mulf %27, %31 : vector<128x128xf32>
    %33 = arith.truncf %32 : vector<128x128xf32> to vector<128x128xbf16>
    %cst_15 = arith.constant dense<0.000000e+00> : vector<128x32xf32>
    %34 = tpu.matmul %33, %19, %cst_15 {dimension_numbers = #tpu.dot_dimension_numbers<[1], [0], [0], [1], [0, 0, 1, 1], [], []>} : vector<128x128xbf16>, vector<128x32xbf16>, vector<128x32xf32> -> vector<128x32xf32>
    %c0_16 = arith.constant 0 : index
    %c0_17 = arith.constant 0 : index
    %35 = vector.load %arg8[%c0_16, %c0_17] : memref<128x128xf32, #tpu.memory_space<vmem>>, vector<128x128xf32>
    %36 = arith.truncf %34 : vector<128x32xf32> to vector<128x32xbf16>
    %c0_18 = arith.constant 0 : index
    %c0_19 = arith.constant 0 : index
    %c0_20 = arith.constant 0 : index
    %37 = vector.load %arg5[%c0_18, %c0_19, %c0_20] : memref<1x32x128xbf16, #tpu.memory_space<vmem>>, vector<1x32x128xbf16>
    %38 = vector.shape_cast %37 : vector<1x32x128xbf16> to vector<32x128xbf16>
    %cst_21 = arith.constant dense<0.000000e+00> : vector<128x128xf32>
    %39 = tpu.matmul %36, %38, %cst_21 {dimension_numbers = #tpu.dot_dimension_numbers<[1], [0], [0], [1], [0, 0, 1, 1], [], []>} : vector<128x32xbf16>, vector<32x128xbf16>, vector<128x128xf32> -> vector<128x128xf32>
    %40 = arith.addf %35, %39 : vector<128x128xf32>
    %c0_22 = arith.constant 0 : index
    %c0_23 = arith.constant 0 : index
    %41 = vector.load %arg8[%c0_22, %c0_23] : memref<128x128xf32, #tpu.memory_space<vmem>>, vector<128x128xf32>
    tpu.vector_store %arg8[%c0_22, %c0_23], %40 {strides = array<i32>} : memref<128x128xf32, #tpu.memory_space<vmem>>, vector<128x128xf32>,
    %c3_i32 = arith.constant 3 : i32
    %42 = arith.cmpi eq, %arg1, %c3_i32 : i32
    %43 = arith.extui %42 : i1 to i32
    %c0_i32_24 = arith.constant 0 : i32
    %44 = arith.cmpi ne, %43, %c0_i32_24 : i32
    scf.if %44 {
      %c0_25 = arith.constant 0 : index
      %c0_26 = arith.constant 0 : index
      %45 = vector.load %arg8[%c0_25, %c0_26] : memref<128x128xf32, #tpu.memory_space<vmem>>, vector<128x128xf32>
      %c0_27 = arith.constant 0 : index
      %c0_28 = arith.constant 0 : index
      %46 = vector.load %arg6[%c0_27, %c0_28] : memref<1x128xf32, #tpu.memory_space<vmem>>, vector<1x128xf32>
      %47 = vector.broadcast %46 : vector<1x128xf32> to vector<128x128xf32>
      %48 = arith.addf %45, %47 : vector<128x128xf32>
      %c0_29 = arith.constant 0 : index
      %c0_30 = arith.constant 0 : index
      %c0_31 = arith.constant 0 : index
      %49 = vector.load %arg7[%c0_29, %c0_30, %c0_31] : memref<1x128x128xf32, #tpu.memory_space<vmem>>, vector<1x128x128xf32>
      %50 = vector.shape_cast %49 : vector<1x128x128xf32> to vector<128x128xf32>
      %51 = vector.shape_cast %48 : vector<128x128xf32> to vector<1x128x128xf32>
      tpu.vector_store %arg7[%c0_29, %c0_30, %c0_31], %51 {strides = array<i32>} : memref<1x128x128xf32, #tpu.memory_space<vmem>>, vector<1x128x128xf32>,
    } else {
    }
    return
  }
  func.func @transform_0(%arg0: i32, %arg1: i32) -> (i32, i32, i32) {
    %c0_i32 = arith.constant 0 : i32
    %c0_i32_0 = arith.constant 0 : i32
    %c0_i32_1 = arith.constant 0 : i32
    return %arg0, %c0_i32, %c0_i32_0 : i32, i32, i32
  }
  func.func @transform_1(%arg0: i32, %arg1: i32) -> (i32, i32, i32) {
    %c0_i32 = arith.constant 0 : i32
    %c0_i32_0 = arith.constant 0 : i32
    %c0_i32_1 = arith.constant 0 : i32
    return %arg1, %c0_i32, %c0_i32_0 : i32, i32, i32
  }
  func.func @transform_2(%arg0: i32, %arg1: i32) -> (i32, i32, i32) {
    %c0_i32 = arith.constant 0 : i32
    %c0_i32_0 = arith.constant 0 : i32
    %c0_i32_1 = arith.constant 0 : i32
    return %arg1, %c0_i32, %c0_i32_0 : i32, i32, i32
  }
  func.func @transform_3(%arg0: i32, %arg1: i32) -> (i32, i32, i32) {
    %c0_i32 = arith.constant 0 : i32
    %c0_i32_0 = arith.constant 0 : i32
    %c0_i32_1 = arith.constant 0 : i32
    return %arg1, %c0_i32, %c0_i32_0 : i32, i32, i32
  }
  func.func @transform_4(%arg0: i32, %arg1: i32) -> (i32, i32) {
    %c0_i32 = arith.constant 0 : i32
    %c0_i32_0 = arith.constant 0 : i32
    %c0_i32_1 = arith.constant 0 : i32
    return %c0_i32, %c0_i32_0 : i32, i32
  }
  func.func @transform_5(%arg0: i32, %arg1: i32) -> (i32, i32, i32) {
    %c0_i32 = arith.constant 0 : i32
    %c0_i32_0 = arith.constant 0 : i32
    %c0_i32_1 = arith.constant 0 : i32
    return %arg0, %c0_i32, %c0_i32_0 : i32, i32, i32
  }
}

</mosaic_0001>

<llo_original>
// kernel: causal_self_attention.1
$region0: #{causal_self_attention.1}
  #allocation0 [shape = 'u32[]', space=smem, size = 0x4, offset = 0x4, fixed_abs, tag = 'smem constant byte address 0x4 - core index']
  #allocation1 [shape = 'u32[144,128]{1,0:T(1,128)}', space=vmem, size = 0x12000, scoped, tag = 'internal scratch']
  #allocation2 [shape = 'f32[128,128]{1,0:T(8,128)}', space=vmem, size = 0x10000, scoped, tag = 'scratch operand']
  #allocation3 [shape = 'f32[128,128]{1,0:T(8,128)}', space=vmem, size = 0x10000, scoped, tag = 'scratch operand']
  %s0 = inlined_call_operand.vmem [shape: bf16[2,128,128], index: 0, kind: input, shape index: {}]
  %s1 = inlined_call_operand.vmem [shape: bf16[4,128,96], index: 1, kind: input, shape index: {}]
  %s2 = inlined_call_operand.vmem [shape: f32[4,1,96], index: 2, kind: input, shape index: {}]
  %s3 = inlined_call_operand.vmem [shape: bf16[4,32,128], index: 3, kind: input, shape index: {}]
  %s4 = inlined_call_operand.vmem [shape: f32[1,128], index: 4, kind: input, shape index: {}]
  %s5 = inlined_call_operand.hbm [shape: f32[2,128,128], index: 5, kind: output, shape index: {}]
  %s6 = sld [smem:[#allocation0]]
  $region61: #{causal_self_attention.1} parent=0
    _
  %s8 = ssub.s32 1, %s6
  %s9 = scalar_select 0, %s8, %s6
  $region1: #{causal_self_attention.1} parent=0
    #allocation4 [shape = 'u8[131072]{0}', space=vmem, size = 0x20000, scoped, tag = 'output window, operand 0']
    #allocation5 [shape = 's32[2]{0}', space=sflag, size = 0x8, scoped, tag = 'scoped memory for causal_self_attention.1']
    %10 = vsyncpa [#allocation5], 0
    %s11 = scalar_lea.sflag [#allocation5], 1
    %12 = vsyncpa %s11, 0
    loop: start=0, step=1, limit=10
    $region2: #{causal_self_attention.1} parent=1 // loop_pre_header
      _
    $region3: #{causal_self_attention.1} parent=1 // loop_header
      %s14 = sphi 0, %s18
      %p15 = scmp.ge.s32.totalorder %s14, 10
      %s21 = sphi 0, %s33
      %s22 = sphi 0, %s29
      %s23 = sphi 0, %s21
      %s24 = sphi 0, %s22
      %s25 = sphi 0, %s23
      %s26 = sphi 0, %s24
      %s36 = sphi 0, %s38
      %s39 = sphi 0, %s36
      %s40 = sphi 0, %s39
      %s56 = sphi 0, %s40
      %s62 = sphi 0, %s64
      %s65 = sphi 0, %s62
      %s66 = sphi 0, %s65
      %s82 = sphi 0, %s66
      %s88 = sphi 0, %s90
      %s91 = sphi 0, %s88
      %s92 = sphi 0, %s91
      %s108 = sphi 0, %s92
      %s114 = sphi 0, %s116
      %s117 = sphi 0, %s114
      %s118 = sphi 0, %s117
      %s134 = sphi 0, %s118
      %s138 = sphi 0, %s138
      %s140 = sphi 0, %s138
      %s141 = sphi 0, %s140
      %s155 = sphi 0, %s141
      %s161 = sphi 0, %s163
      %s164 = sphi 0, %s161
      %s165 = sphi 0, %s164
      %s181 = sphi 0, %s165
    $region4: #{causal_self_attention.1} parent=1 // loop_header_branch
      %17 = sbr.rel (%p15) target = $region8
    $region5: #{causal_self_attention.1} parent=1 // loop_body
      %s19 = ssub.s32 %s14, 1
      %s20 = ssub.s32 %s14, 2
      %s27 = sadd.s32 1, %s22
      %p28 = scmp.ge.s32.totalorder %s27, 4
      %s29 = scalar_select %p28, 0, %s27
      %s30 = sadd.s32 1, %s21
      %s31 = scalar_select %p28, %s30, %s21
      %p32 = scmp.ge.s32.totalorder %s31, 2
      %s33 = scalar_select %p32, 0, %s31
      %s34 = ssub.s32 %s21, %s33
      %p35 = scmp.eq.s32.totalorder %s34, 0
      %s37 = sadd.s32 %s36, 1
      %s38 = scalar_select %p35, %s36, %s37
      %p41 = pneg %p35
      %p42 = scmp.eq.s32.totalorder %s14, 7
      %p43 = por %p41, %p42
      %p44 = scmp.ne.s32.totalorder %s36, %s39
      %p45 = scmp.eq.s32.totalorder %s14, 0
      %p46 = por %p44, %p45
      %p47 = scmp.ne.s32.totalorder %s36, %s39
      %p48 = scmp.eq.s32.totalorder %s19, 7
      %p49 = por %p47, %p48
      %p50 = scmp.ne.s32.totalorder %s39, %s40
      %p51 = scmp.eq.s32.totalorder %s19, 0
      %p52 = por %p50, %p51
      %p53 = scmp.ne.s32.totalorder %s39, %s40
      %p54 = scmp.eq.s32.totalorder %s20, 7
      %p55 = por %p53, %p54
      %p57 = scmp.ne.s32.totalorder %s40, %s56
      %p58 = scmp.eq.s32.totalorder %s20, 0
      %p59 = por %p57, %p58
      %s60 = ssub.s32 %s22, %s29
      %p61 = scmp.eq.s32.totalorder %s60, 0
      %s63 = sadd.s32 %s62, 1
      %s64 = scalar_select %p61, %s62, %s63
      %p67 = pneg %p61
      %p68 = scmp.eq.s32.totalorder %s14, 7
      %p69 = por %p67, %p68
      %p70 = scmp.ne.s32.totalorder %s62, %s65
      %p71 = scmp.eq.s32.totalorder %s14, 0
      %p72 = por %p70, %p71
      %p73 = scmp.ne.s32.totalorder %s62, %s65
      %p74 = scmp.eq.s32.totalorder %s19, 7
      %p75 = por %p73, %p74
      %p76 = scmp.ne.s32.totalorder %s65, %s66
      %p77 = scmp.eq.s32.totalorder %s19, 0
      %p78 = por %p76, %p77
      %p79 = scmp.ne.s32.totalorder %s65, %s66
      %p80 = scmp.eq.s32.totalorder %s20, 7
      %p81 = por %p79, %p80
      %p83 = scmp.ne.s32.totalorder %s66, %s82
      %p84 = scmp.eq.s32.totalorder %s20, 0
      %p85 = por %p83, %p84
      %s86 = ssub.s32 %s22, %s29
      %p87 = scmp.eq.s32.totalorder %s86, 0
      %s89 = sadd.s32 %s88, 1
      %s90 = scalar_select %p87, %s88, %s89
      %p93 = pneg %p87
      %p94 = scmp.eq.s32.totalorder %s14, 7
      %p95 = por %p93, %p94
      %p96 = scmp.ne.s32.totalorder %s88, %s91
      %p97 = scmp.eq.s32.totalorder %s14, 0
      %p98 = por %p96, %p97
      %p99 = scmp.ne.s32.totalorder %s88, %s91
      %p100 = scmp.eq.s32.totalorder %s19, 7
      %p101 = por %p99, %p100
      %p102 = scmp.ne.s32.totalorder %s91, %s92
      %p103 = scmp.eq.s32.totalorder %s19, 0
      %p104 = por %p102, %p103
      %p105 = scmp.ne.s32.totalorder %s91, %s92
      %p106 = scmp.eq.s32.totalorder %s20, 7
      %p107 = por %p105, %p106
      %p109 = scmp.ne.s32.totalorder %s92, %s108
      %p110 = scmp.eq.s32.totalorder %s20, 0
      %p111 = por %p109, %p110
      %s112 = ssub.s32 %s22, %s29
      %p113 = scmp.eq.s32.totalorder %s112, 0
      %s115 = sadd.s32 %s114, 1
      %s116 = scalar_select %p113, %s114, %s115
      %p119 = pneg %p113
      %p120 = scmp.eq.s32.totalorder %s14, 7
      %p121 = por %p119, %p120
      %p122 = scmp.ne.s32.totalorder %s114, %s117
      %p123 = scmp.eq.s32.totalorder %s14, 0
      %p124 = por %p122, %p123
      %p125 = scmp.ne.s32.totalorder %s114, %s117
      %p126 = scmp.eq.s32.totalorder %s19, 7
      %p127 = por %p125, %p126
      %p128 = scmp.ne.s32.totalorder %s117, %s118
      %p129 = scmp.eq.s32.totalorder %s19, 0
      %p130 = por %p128, %p129
      %p131 = scmp.ne.s32.totalorder %s117, %s118
      %p132 = scmp.eq.s32.totalorder %s20, 7
      %p133 = por %p131, %p132
      %p135 = scmp.ne.s32.totalorder %s118, %s134
      %p136 = scmp.eq.s32.totalorder %s20, 0
      %p137 = por %p135, %p136
      %s139 = sadd.s32 %s138, 1
      %p142 = scmp.eq.s32.totalorder %s14, 7
      %p143 = scmp.ne.s32.totalorder %s138, %s140
      %p144 = scmp.eq.s32.totalorder %s14, 0
      %p145 = por %p143, %p144
      %p146 = scmp.ne.s32.totalorder %s138, %s140
      %p147 = scmp.eq.s32.totalorder %s19, 7
      %p148 = por %p146, %p147
      %p149 = scmp.ne.s32.totalorder %s140, %s141
      %p150 = scmp.eq.s32.totalorder %s19, 0
      %p151 = por %p149, %p150
      %p152 = scmp.ne.s32.totalorder %s140, %s141
      %p153 = scmp.eq.s32.totalorder %s20, 7
      %p154 = por %p152, %p153
      %p156 = scmp.ne.s32.totalorder %s141, %s155
      %p157 = scmp.eq.s32.totalorder %s20, 0
      %p158 = por %p156, %p157
      %s159 = ssub.s32 %s21, %s33
      %p160 = scmp.eq.s32.totalorder %s159, 0
      %s162 = sadd.s32 %s161, 1
      %s163 = scalar_select %p160, %s161, %s162
      %p166 = pneg %p160
      %p167 = scmp.eq.s32.totalorder %s14, 7
      %p168 = por %p166, %p167
      %p169 = scmp.ne.s32.totalorder %s161, %s164
      %p170 = scmp.eq.s32.totalorder %s14, 0
      %p171 = por %p169, %p170
      %p172 = scmp.ne.s32.totalorder %s161, %s164
      %p173 = scmp.eq.s32.totalorder %s19, 7
      %p174 = por %p172, %p173
      %p175 = scmp.ne.s32.totalorder %s164, %s165
      %p176 = scmp.eq.s32.totalorder %s19, 0
      %p177 = por %p175, %p176
      %p178 = scmp.ne.s32.totalorder %s164, %s165
      %p179 = scmp.eq.s32.totalorder %s20, 7
      %p180 = por %p178, %p179
      %p182 = scmp.ne.s32.totalorder %s165, %s181
      %p183 = scmp.eq.s32.totalorder %s20, 0
      %p184 = por %p182, %p183
      %p185 = scmp.le.s32.totalorder 1, %s14
      %p186 = scmp.lt.s32.totalorder %s14, 9
      %p187 = pnand %p185, %p186
      %p188 = pneg %p187
      // Predicated region
      $region9: #{causal_self_attention.1} parent=5 // pred_check
        _
      $region10: #{causal_self_attention.1} parent=5 // pred_check_branch
        %190 = sbr.rel (%p187) target = $region12
      $region11: #{causal_self_attention.1} parent=5 // pred_region
        %s191 = ssub.s32 %s14, 1
        // Predicated region
        $region13: #{causal_self_attention.1} parent=11 // pred_check
          %p192 = pneg %p151
        $region14: #{causal_self_attention.1} parent=11 // pred_check_branch
          %194 = sbr.rel (%p192) target = $region16
        $region15: #{causal_self_attention.1} parent=11 // pred_region
          _
        $region16: #{causal_self_attention.1} parent=11 // pred_fallthru
          _
      $region12: #{causal_self_attention.1} parent=5 // pred_fallthru
        _
      %p195 = scmp.lt.s32.totalorder %s14, 8
      // Predicated region
      $region17: #{causal_self_attention.1} parent=5 // pred_check
        %p196 = pneg %p195
      $region18: #{causal_self_attention.1} parent=5 // pred_check_branch
        %198 = sbr.rel (%p196) target = $region20
      $region19: #{causal_self_attention.1} parent=5 // pred_region
        // Predicated region
        $region21: #{causal_self_attention.1} parent=19 // pred_check
          %p199 = pneg %p46
        $region22: #{causal_self_attention.1} parent=19 // pred_check_branch
          %201 = sbr.rel (%p199) target = $region24
        $region23: #{causal_self_attention.1} parent=19 // pred_region
          %p202 = scmp.lt.s32.totalorder %s21, 1
          %s203 = scalar_select %p202, %s21, 1
          %s204 = smul.addr %s203, 16
          %s205 = smul.addr %s204, 4
          %s206 = scalar_lea.vmem %s0, %s205
        $region24: #{causal_self_attention.1} parent=19 // pred_fallthru
          _
        // Predicated region
        $region25: #{causal_self_attention.1} parent=19 // pred_check
          %p207 = pneg %p72
        $region26: #{causal_self_attention.1} parent=19 // pred_check_branch
          %209 = sbr.rel (%p207) target = $region28
        $region27: #{causal_self_attention.1} parent=19 // pred_region
          %p210 = scmp.lt.s32.totalorder %s22, 3
          %s211 = scalar_select %p210, %s22, 3
          %s212 = smul.addr %s211, 16
          %s213 = smul.addr %s212, 4
          %s214 = scalar_lea.vmem %s1, %s213
        $region28: #{causal_self_attention.1} parent=19 // pred_fallthru
          _
        // Predicated region
        $region29: #{causal_self_attention.1} parent=19 // pred_check
          %p215 = pneg %p98
        $region30: #{causal_self_attention.1} parent=19 // pred_check_branch
          %217 = sbr.rel (%p215) target = $region32
        $region31: #{causal_self_attention.1} parent=19 // pred_region
          %p218 = scmp.lt.s32.totalorder %s22, 3
          %s219 = scalar_select %p218, %s22, 3
          %s220 = scalar_lea.vmem %s2, %s219
        $region32: #{causal_self_attention.1} parent=19 // pred_fallthru
          _
        // Predicated region
        $region33: #{causal_self_attention.1} parent=19 // pred_check
          %p221 = pneg %p124
        $region34: #{causal_self_attention.1} parent=19 // pred_check_branch
          %223 = sbr.rel (%p221) target = $region36
        $region35: #{causal_self_attention.1} parent=19 // pred_region
          %p224 = scmp.lt.s32.totalorder %s22, 3
          %s225 = scalar_select %p224, %s22, 3
          %s226 = smul.addr %s225, 4
          %s227 = smul.addr %s226, 4
          %s228 = scalar_lea.vmem %s3, %s227
        $region36: #{causal_self_attention.1} parent=19 // pred_fallthru
          _
      $region20: #{causal_self_attention.1} parent=5 // pred_fallthru
        _
      %p229 = scmp.le.s32.totalorder 1, %s14
      %p230 = scmp.lt.s32.totalorder %s14, 9
      %p231 = pnand %p229, %p230
      %p232 = pneg %p231
      // Predicated region
      $region37: #{causal_self_attention.1} parent=5 // pred_check
        _
      $region38: #{causal_self_attention.1} parent=5 // pred_check_branch
        %234 = sbr.rel (%p231) target = $region40
      $region39: #{causal_self_attention.1} parent=5 // pred_region
        %s235 = ssub.s32 %s14, 1
        %p236 = scmp.lt.s32.totalorder %s23, 1
        %s237 = scalar_select %p236, %s23, 1
        %s238 = smul.addr %s237, 16
        %s239 = smul.addr %s238, 4
        %s240 = scalar_lea.vmem %s0, %s239
        %p241 = pneg %p52
        %p242 = pneg %p49
        %p243 = scmp.lt.s32.totalorder %s24, 3
        %s244 = scalar_select %p243, %s24, 3
        %s245 = smul.addr %s244, 16
        %s246 = smul.addr %s245, 4
        %s247 = scalar_lea.vmem %s1, %s246
        %p248 = pneg %p78
        %p249 = pneg %p75
        %p250 = scmp.lt.s32.totalorder %s24, 3
        %s251 = scalar_select %p250, %s24, 3
        %s252 = scalar_lea.vmem %s2, %s251
        %p253 = pneg %p104
        %p254 = pneg %p101
        %p255 = scmp.lt.s32.totalorder %s24, 3
        %s256 = scalar_select %p255, %s24, 3
        %s257 = smul.addr %s256, 4
        %s258 = smul.addr %s257, 4
        %s259 = scalar_lea.vmem %s3, %s258
        %p260 = pneg %p130
        %p261 = pneg %p127
        %p262 = pneg %p151
        %p263 = pneg %p148
        %p264 = pneg %p177
        %p265 = pneg %p174
        %s266 = sand.u32 %s164, 1
        %s267 = scalar_lea.sflag [#allocation5], %s266
        %s268 = sand.u32 %s164, 1
        %s269 = smul.addr %s268, 128
        %s270 = scalar_lea.vmem [#allocation4], %s269
        %p271 = scmp.lt.s32.totalorder %s23, 1
        %s272 = scalar_select %p271, %s23, 1
        %s273 = smul.addr %s272, 16
        %s274 = smul.addr %s273, 4
        %s275 = scalar_lea.vmem %s0, %s274
        %p276 = scmp.lt.s32.totalorder %s24, 3
        %s277 = scalar_select %p276, %s24, 3
        %s278 = smul.addr %s277, 16
        %s279 = smul.addr %s278, 4
        %s280 = scalar_lea.vmem %s1, %s279
        %p281 = scmp.lt.s32.totalorder %s24, 3
        %s282 = scalar_select %p281, %s24, 3
        %s283 = scalar_lea.vmem %s2, %s282
        %p284 = scmp.lt.s32.totalorder %s24, 3
        %s285 = scalar_select %p284, %s24, 3
        %s286 = smul.addr %s285, 4
        %s287 = smul.addr %s286, 4
        %s288 = scalar_lea.vmem %s3, %s287
        %p290 = scmp.eq.s32.totalorder %s24, 0
        // Predicated region
        $region41: #{causal_self_attention.1} parent=39 // pred_check
          %p291 = pneg %p290
        $region42: #{causal_self_attention.1} parent=39 // pred_check_branch
          %293 = sbr.rel (%p291) target = $region44
        $region43: #{causal_self_attention.1} parent=39 // pred_region
          %294 = vst [vmem:[#allocation2] sm:$0xff] 0.0
          %295 = vst [vmem:[#allocation2 + $0x8] sm:$0xff] 0.0
          %296 = vst [vmem:[#allocation2 + $0x10] sm:$0xff] 0.0
          %297 = vst [vmem:[#allocation2 + $0x18] sm:$0xff] 0.0
          %298 = vst [vmem:[#allocation2 + $0x20] sm:$0xff] 0.0
          %299 = vst [vmem:[#allocation2 + $0x28] sm:$0xff] 0.0
          %300 = vst [vmem:[#allocation2 + $0x30] sm:$0xff] 0.0
          %301 = vst [vmem:[#allocation2 + $0x38] sm:$0xff] 0.0
          %302 = vst [vmem:[#allocation2 + $0x40] sm:$0xff] 0.0
          %303 = vst [vmem:[#allocation2 + $0x48] sm:$0xff] 0.0
          %304 = vst [vmem:[#allocation2 + $0x50] sm:$0xff] 0.0
          %305 = vst [vmem:[#allocation2 + $0x58] sm:$0xff] 0.0
          %306 = vst [vmem:[#allocation2 + $0x60] sm:$0xff] 0.0
          %307 = vst [vmem:[#allocation2 + $0x68] sm:$0xff] 0.0
          %308 = vst [vmem:[#allocation2 + $0x70] sm:$0xff] 0.0
          %309 = vst [vmem:[#allocation2 + $0x78] sm:$0xff] 0.0
          %v310 = vlaneseq
          %v311 = vshrl.u32 %v310, 7
          %v312 = vadd.s32 %v311, 8
          %v313 = vadd.s32 %v311, 16
          %v314 = vadd.s32 %v311, 24
          %v315 = vadd.s32 %v311, 32
          %v316 = vadd.s32 %v311, 40
          %v317 = vadd.s32 %v311, 48
          %v318 = vadd.s32 %v311, 56
          %v319 = vadd.s32 %v311, 64
          %v320 = vadd.s32 %v311, 72
          %v321 = vadd.s32 %v311, 80
          %v322 = vadd.s32 %v311, 88
          %v323 = vadd.s32 %v311, 96
          %v324 = vadd.s32 %v311, 104
          %v325 = vadd.s32 %v311, 112
          %v326 = vadd.s32 %v311, 120
          %v327 = vlaneseq
          %v328 = vand.u32 %v327, 127
          %vm329 = vcmp.ge.s32.totalorder %v311, %v328
          %vm330 = vcmp.ge.s32.totalorder %v312, %v328
          %vm331 = vcmp.ge.s32.totalorder %v313, %v328
          %vm332 = vcmp.ge.s32.totalorder %v314, %v328
          %vm333 = vcmp.ge.s32.totalorder %v315, %v328
          %vm334 = vcmp.ge.s32.totalorder %v316, %v328
          %vm335 = vcmp.ge.s32.totalorder %v317, %v328
          %vm336 = vcmp.ge.s32.totalorder %v318, %v328
          %vm337 = vcmp.ge.s32.totalorder %v319, %v328
          %vm338 = vcmp.ge.s32.totalorder %v320, %v328
          %vm339 = vcmp.ge.s32.totalorder %v321, %v328
          %vm340 = vcmp.ge.s32.totalorder %v322, %v328
          %vm341 = vcmp.ge.s32.totalorder %v323, %v328
          %vm342 = vcmp.ge.s32.totalorder %v324, %v328
          %vm343 = vcmp.ge.s32.totalorder %v325, %v328
          %vm344 = vcmp.ge.s32.totalorder %v326, %v328
          %v345 = vsel %vm329, 0.0, -1e+30
          %v346 = vsel %vm330, 0.0, -1e+30
          %v347 = vsel %vm331, 0.0, -1e+30
          %v348 = vsel %vm332, 0.0, -1e+30
          %v349 = vsel %vm333, 0.0, -1e+30
          %v350 = vsel %vm334, 0.0, -1e+30
          %v351 = vsel %vm335, 0.0, -1e+30
          %v352 = vsel %vm336, 0.0, -1e+30
          %v353 = vsel %vm337, 0.0, -1e+30
          %v354 = vsel %vm338, 0.0, -1e+30
          %v355 = vsel %vm339, 0.0, -1e+30
          %v356 = vsel %vm340, 0.0, -1e+30
          %v357 = vsel %vm341, 0.0, -1e+30
          %v358 = vsel %vm342, 0.0, -1e+30
          %v359 = vsel %vm343, 0.0, -1e+30
          %v360 = vsel %vm344, 0.0, -1e+30
          %361 = vst [vmem:[#allocation3] sm:$0xff] %v345
          %362 = vst [vmem:[#allocation3 + $0x8] sm:$0xff] %v346
          %363 = vst [vmem:[#allocation3 + $0x10] sm:$0xff] %v347
          %364 = vst [vmem:[#allocation3 + $0x18] sm:$0xff] %v348
          %365 = vst [vmem:[#allocation3 + $0x20] sm:$0xff] %v349
          %366 = vst [vmem:[#allocation3 + $0x28] sm:$0xff] %v350
          %367 = vst [vmem:[#allocation3 + $0x30] sm:$0xff] %v351
          %368 = vst [vmem:[#allocation3 + $0x38] sm:$0xff] %v352
          %369 = vst [vmem:[#allocation3 + $0x40] sm:$0xff] %v353
          %370 = vst [vmem:[#allocation3 + $0x48] sm:$0xff] %v354
          %371 = vst [vmem:[#allocation3 + $0x50] sm:$0xff] %v355
          %372 = vst [vmem:[#allocation3 + $0x58] sm:$0xff] %v356
          %373 = vst [vmem:[#allocation3 + $0x60] sm:$0xff] %v357
          %374 = vst [vmem:[#allocation3 + $0x68] sm:$0xff] %v358
          %375 = vst [vmem:[#allocation3 + $0x70] sm:$0xff] %v359
          %376 = vst [vmem:[#allocation3 + $0x78] sm:$0xff] %v360
        $region44: #{causal_self_attention.1} parent=39 // pred_fallthru
          _
        %v377 = vld [vmem:[%s275] sm:$0xf]
        %v378 = vld [vmem:[%s275 + $0x4] sm:$0xf]
        %v379 = vld [vmem:[%s275 + $0x8] sm:$0xf]
        %v380 = vld [vmem:[%s275 + $0xc] sm:$0xf]
        %v381 = vld [vmem:[%s275 + $0x10] sm:$0xf]
        %v382 = vld [vmem:[%s275 + $0x14] sm:$0xf]
        %v383 = vld [vmem:[%s275 + $0x18] sm:$0xf]
        %v384 = vld [vmem:[%s275 + $0x1c] sm:$0xf]
        %v385 = vld [vmem:[%s275 + $0x20] sm:$0xf]
        %v386 = vld [vmem:[%s275 + $0x24] sm:$0xf]
        %v387 = vld [vmem:[%s275 + $0x28] sm:$0xf]
        %v388 = vld [vmem:[%s275 + $0x2c] sm:$0xf]
        %v389 = vld [vmem:[%s275 + $0x30] sm:$0xf]
        %v390 = vld [vmem:[%s275 + $0x34] sm:$0xf]
        %v391 = vld [vmem:[%s275 + $0x38] sm:$0xf]
        %v392 = vld [vmem:[%s275 + $0x3c] sm:$0xf]
        %v393 = vld [vmem:[%s280] sm:$0xf]
        %v394 = vld [vmem:[%s280 + $0x4] sm:$0xf]
        %v395 = vld [vmem:[%s280 + $0x8] sm:$0xf]
        %v396 = vld [vmem:[%s280 + $0xc] sm:$0xf]
        %v397 = vld [vmem:[%s280 + $0x10] sm:$0xf]
        %v398 = vld [vmem:[%s280 + $0x14] sm:$0xf]
        %v399 = vld [vmem:[%s280 + $0x18] sm:$0xf]
        %v400 = vld [vmem:[%s280 + $0x1c] sm:$0xf]
        %v401 = vld [vmem:[%s280 + $0x20] sm:$0xf]
        %v402 = vld [vmem:[%s280 + $0x24] sm:$0xf]
        %v403 = vld [vmem:[%s280 + $0x28] sm:$0xf]
        %v404 = vld [vmem:[%s280 + $0x2c] sm:$0xf]
        %v405 = vld [vmem:[%s280 + $0x30] sm:$0xf]
        %v406 = vld [vmem:[%s280 + $0x34] sm:$0xf]
        %v407 = vld [vmem:[%s280 + $0x38] sm:$0xf]
        %v408 = vld [vmem:[%s280 + $0x3c] sm:$0xf]
        %v409 = vld [vmem:[%s283] sm:$0x1]
        %v411 = vlaneseq
        %v412 = vshrl.u32 %v411, 7
        %v413 = vsub.s32 0, %v412
        %v414 = vrot.slane %v409, %v413
        %v432 = vunpack.c.l.b16 %v377
        %v433 = vunpack.c.l.b16 %v378
        %v434 = vunpack.c.l.b16 %v379
        %v435 = vunpack.c.l.b16 %v380
        %v436 = vunpack.c.l.b16 %v381
        %v437 = vunpack.c.l.b16 %v382
        %v438 = vunpack.c.l.b16 %v383
        %v439 = vunpack.c.l.b16 %v384
        %v440 = vunpack.c.l.b16 %v385
        %v441 = vunpack.c.l.b16 %v386
        %v442 = vunpack.c.l.b16 %v387
        %v443 = vunpack.c.l.b16 %v388
        %v444 = vunpack.c.l.b16 %v389
        %v445 = vunpack.c.l.b16 %v390
        %v446 = vunpack.c.l.b16 %v391
        %v447 = vunpack.c.l.b16 %v392
        %v448 = vpack.c.b16 %v433, %v432
        %v449 = vpack.c.b16 %v435, %v434
        %v450 = vpack.c.b16 %v437, %v436
        %v451 = vpack.c.b16 %v439, %v438
        %v452 = vpack.c.b16 %v441, %v440
        %v453 = vpack.c.b16 %v443, %v442
        %v454 = vpack.c.b16 %v445, %v444
        %v455 = vpack.c.b16 %v447, %v446
        %v480 = vunpack.c.l.b16 %v393
        %v481 = vunpack.c.l.b16 %v394
        %v482 = vunpack.c.l.b16 %v395
        %v483 = vunpack.c.l.b16 %v396
        %v484 = vunpack.c.l.b16 %v397
        %v485 = vunpack.c.l.b16 %v398
        %v486 = vunpack.c.l.b16 %v399
        %v487 = vunpack.c.l.b16 %v400
        %v488 = vunpack.c.l.b16 %v401
        %v489 = vunpack.c.l.b16 %v402
        %v490 = vunpack.c.l.b16 %v403
        %v491 = vunpack.c.l.b16 %v404
        %v492 = vunpack.c.l.b16 %v405
        %v493 = vunpack.c.l.b16 %v406
        %v494 = vunpack.c.l.b16 %v407
        %v495 = vunpack.c.l.b16 %v408
        %v496 = vpack.c.b16 %v481, %v480
        %v497 = vpack.c.b16 %v483, %v482
        %v498 = vpack.c.b16 %v485, %v484
        %v499 = vpack.c.b16 %v487, %v486
        %v500 = vpack.c.b16 %v489, %v488
        %v501 = vpack.c.b16 %v491, %v490
        %v502 = vpack.c.b16 %v493, %v492
        %v503 = vpack.c.b16 %v495, %v494
        %512 = vmatprep.subr.bf16.mxu0 0
        %513 = vmatpush1.bf16.msra.mxu0 %v496
        %514 = vmatprep.subr.bf16.mxu0 0
        %515 = vmatpush1.bf16.msra.mxu0 %v497
        %516 = vmatprep.subr.bf16.mxu0 0
        %517 = vmatpush1.bf16.msra.mxu0 %v498
        %518 = vmatprep.subr.bf16.mxu0 0
        %519 = vmatpush1.bf16.msra.mxu0 %v499
        %520 = vmatprep.subr.bf16.mxu0 0
        %521 = vmatpush1.bf16.msra.mxu0 %v500
        %522 = vmatprep.subr.bf16.mxu0 0
        %523 = vmatpush1.bf16.msra.mxu0 %v501
        %524 = vmatprep.subr.bf16.mxu0 0
        %525 = vmatpush1.bf16.msra.mxu0 %v502
        %526 = vmatprep.subr.bf16.mxu0 0
        %527 = vmatpush1.bf16.msra.mxu0 %v503
        %528 = vmatprep.subr.bf16.mxu0 0
        %529 = vmatpush1.bf16.msra.mxu0 0
        %530 = vmatprep.subr.bf16.mxu0 0
        %531 = vmatpush1.bf16.msra.mxu0 0
        %532 = vmatprep.subr.bf16.mxu0 0
        %533 = vmatpush1.bf16.msra.mxu0 0
        %534 = vmatprep.subr.bf16.mxu0 0
        %535 = vmatpush1.bf16.msra.mxu0 0
        %536 = vmatprep.subr.bf16.mxu0 0
        %537 = vmatpush1.bf16.msra.mxu0 0
        %538 = vmatprep.subr.bf16.mxu0 0
        %539 = vmatpush1.bf16.msra.mxu0 0
        %540 = vmatprep.subr.bf16.mxu0 0
        %541 = vmatpush1.bf16.msra.mxu0 0
        %542 = vmatprep.subr.bf16.mxu0 0
        %543 = vmatpush1.bf16.msra.mxu0 0
        %544 = vmatprep.mubr.bf16.mxu0 0
        %545 = vmatmul.mubr.bf16.gmra.mrb[0].mxu0 %v448
        %v546 = vpop.f32.mrb[0].mxu0
        %v547 = vadd.f32 %v414, %v546
        %v548 = vpop.f32.mrb[0].mxu0
        %v549 = vpop.f32.mrb[0].mxu0
        %v550 = vadd.f32 %v414, %v549
        %v551 = vpop.f32.mrb[0].mxu0
        %552 = vmatprep.mubr.bf16.mxu0 0
        %553 = vmatmul.mubr.bf16.gmra.mrb[0].mxu0 %v449
        %v554 = vpop.f32.mrb[0].mxu0
        %v555 = vadd.f32 %v414, %v554
        %v556 = vpop.f32.mrb[0].mxu0
        %v557 = vpop.f32.mrb[0].mxu0
        %v558 = vadd.f32 %v414, %v557
        %v559 = vpop.f32.mrb[0].mxu0
        %560 = vmatprep.mubr.bf16.mxu0 0
        %561 = vmatmul.mubr.bf16.gmra.mrb[0].mxu0 %v450
        %v562 = vpop.f32.mrb[0].mxu0
        %v563 = vadd.f32 %v414, %v562
        %v564 = vpop.f32.mrb[0].mxu0
        %v565 = vpop.f32.mrb[0].mxu0
        %v566 = vadd.f32 %v414, %v565
        %v567 = vpop.f32.mrb[0].mxu0
        %568 = vmatprep.mubr.bf16.mxu0 0
        %569 = vmatmul.mubr.bf16.gmra.mrb[0].mxu0 %v451
        %v570 = vpop.f32.mrb[0].mxu0
        %v571 = vadd.f32 %v414, %v570
        %v572 = vpop.f32.mrb[0].mxu0
        %v573 = vpop.f32.mrb[0].mxu0
        %v574 = vadd.f32 %v414, %v573
        %v575 = vpop.f32.mrb[0].mxu0
        %576 = vmatprep.mubr.bf16.mxu0 0
        %577 = vmatmul.mubr.bf16.gmra.mrb[0].mxu0 %v452
        %v578 = vpop.f32.mrb[0].mxu0
        %v579 = vadd.f32 %v414, %v578
        %v580 = vpop.f32.mrb[0].mxu0
        %v581 = vpop.f32.mrb[0].mxu0
        %v582 = vadd.f32 %v414, %v581
        %v583 = vpop.f32.mrb[0].mxu0
        %584 = vmatprep.mubr.bf16.mxu0 0
        %585 = vmatmul.mubr.bf16.gmra.mrb[0].mxu0 %v453
        %v586 = vpop.f32.mrb[0].mxu0
        %v587 = vadd.f32 %v414, %v586
        %v588 = vpop.f32.mrb[0].mxu0
        %v589 = vpop.f32.mrb[0].mxu0
        %v590 = vadd.f32 %v414, %v589
        %v591 = vpop.f32.mrb[0].mxu0
        %592 = vmatprep.mubr.bf16.mxu0 0
        %593 = vmatmul.mubr.bf16.gmra.mrb[0].mxu0 %v454
        %v594 = vpop.f32.mrb[0].mxu0
        %v595 = vadd.f32 %v414, %v594
        %v596 = vpop.f32.mrb[0].mxu0
        %v597 = vpop.f32.mrb[0].mxu0
        %v598 = vadd.f32 %v414, %v597
        %v599 = vpop.f32.mrb[0].mxu0
        %600 = vmatprep.mubr.bf16.mxu0 0
        %601 = vmatmul.mubr.bf16.gmra.mrb[0].mxu0 %v455
        %v602 = vpop.f32.mrb[0].mxu0
        %v603 = vadd.f32 %v414, %v602
        %v604 = vpop.f32.mrb[0].mxu0
        %v605 = vpop.f32.mrb[0].mxu0
        %v606 = vadd.f32 %v414, %v605
        %v607 = vpop.f32.mrb[0].mxu0
        %608 = vdwg.mxu0
        %v609 = vmul.f32 %v547, 0.17677669
        %v610 = vmul.f32 %v550, 0.17677669
        %v611 = vmul.f32 %v555, 0.17677669
        %v612 = vmul.f32 %v558, 0.17677669
        %v613 = vmul.f32 %v563, 0.17677669
        %v614 = vmul.f32 %v566, 0.17677669
        %v615 = vmul.f32 %v571, 0.17677669
        %v616 = vmul.f32 %v574, 0.17677669
        %v617 = vmul.f32 %v579, 0.17677669
        %v618 = vmul.f32 %v582, 0.17677669
        %v619 = vmul.f32 %v587, 0.17677669
        %v620 = vmul.f32 %v590, 0.17677669
        %v621 = vmul.f32 %v595, 0.17677669
        %v622 = vmul.f32 %v598, 0.17677669
        %v623 = vmul.f32 %v603, 0.17677669
        %v624 = vmul.f32 %v606, 0.17677669
        %v625 = vpack.c.bf16 %v610, %v609
        %v626 = vpack.c.bf16 %v612, %v611
        %v627 = vpack.c.bf16 %v614, %v613
        %v628 = vpack.c.bf16 %v616, %v615
        %v629 = vpack.c.bf16 %v618, %v617
        %v630 = vpack.c.bf16 %v620, %v619
        %v631 = vpack.c.bf16 %v622, %v621
        %v632 = vpack.c.bf16 %v624, %v623
        %v633 = vpack.c.bf16 %v550, %v547
        %v634 = vpack.c.bf16 %v558, %v555
        %v635 = vpack.c.bf16 %v566, %v563
        %v636 = vpack.c.bf16 %v574, %v571
        %v637 = vpack.c.bf16 %v582, %v579
        %v638 = vpack.c.bf16 %v590, %v587
        %v639 = vpack.c.bf16 %v598, %v595
        %v640 = vpack.c.bf16 %v606, %v603
        %v641 = vld [vmem:[#allocation3] sm:$0xff]
        %v642 = vld [vmem:[#allocation3 + $0x8] sm:$0xff]
        %v643 = vld [vmem:[#allocation3 + $0x10] sm:$0xff]
        %v644 = vld [vmem:[#allocation3 + $0x18] sm:$0xff]
        %v645 = vld [vmem:[#allocation3 + $0x20] sm:$0xff]
        %v646 = vld [vmem:[#allocation3 + $0x28] sm:$0xff]
        %v647 = vld [vmem:[#allocation3 + $0x30] sm:$0xff]
        %v648 = vld [vmem:[#allocation3 + $0x38] sm:$0xff]
        %v649 = vld [vmem:[#allocation3 + $0x40] sm:$0xff]
        %v650 = vld [vmem:[#allocation3 + $0x48] sm:$0xff]
        %v651 = vld [vmem:[#allocation3 + $0x50] sm:$0xff]
        %v652 = vld [vmem:[#allocation3 + $0x58] sm:$0xff]
        %v653 = vld [vmem:[#allocation3 + $0x60] sm:$0xff]
        %v654 = vld [vmem:[#allocation3 + $0x68] sm:$0xff]
        %v655 = vld [vmem:[#allocation3 + $0x70] sm:$0xff]
        %v656 = vld [vmem:[#allocation3 + $0x78] sm:$0xff]
        %665 = vrot.lane.b32.xlu0 %v633, 96
        %v666 = vpop.permute.xlu0 %665
        %667 = vrot.lane.b32.xlu0 %v634, 96
        %v668 = vpop.permute.xlu0 %667
        %669 = vrot.lane.b32.xlu0 %v635, 96
        %v670 = vpop.permute.xlu0 %669
        %671 = vrot.lane.b32.xlu0 %v636, 96
        %v672 = vpop.permute.xlu0 %671
        %673 = vrot.lane.b32.xlu0 %v637, 96
        %v674 = vpop.permute.xlu0 %673
        %675 = vrot.lane.b32.xlu0 %v638, 96
        %v676 = vpop.permute.xlu0 %675
        %677 = vrot.lane.b32.xlu0 %v639, 96
        %v678 = vpop.permute.xlu0 %677
        %679 = vrot.lane.b32.xlu0 %v640, 96
        %v680 = vpop.permute.xlu0 %679
        %vm681 = vcmask 261120
        %v683 = vsel %vm681, %v625, 0
        %v686 = vsel %vm681, %v626, 0
        %v689 = vsel %vm681, %v627, 0
        %v692 = vsel %vm681, %v628, 0
        %v695 = vsel %vm681, %v629, 0
        %v698 = vsel %vm681, %v630, 0
        %v701 = vsel %vm681, %v631, 0
        %v704 = vsel %vm681, %v632, 0
        %v707 = vsel %vm681, %v666, 0
        %v710 = vsel %vm681, %v668, 0
        %v713 = vsel %vm681, %v670, 0
        %v716 = vsel %vm681, %v672, 0
        %v719 = vsel %vm681, %v674, 0
        %v722 = vsel %vm681, %v676, 0
        %v725 = vsel %vm681, %v678, 0
        %v728 = vsel %vm681, %v680, 0
        %730 = vmatprep.subr.bf16.mxu0 0
        %731 = vmatpush1.bf16.xpose.msra.mxu0 %v707
        %732 = vmatprep.subr.bf16.mxu0 0
        %733 = vmatpush1.bf16.xpose.msra.mxu0 %v710
        %734 = vmatprep.subr.bf16.mxu0 0
        %735 = vmatpush1.bf16.xpose.msra.mxu0 %v713
        %736 = vmatprep.subr.bf16.mxu0 0
        %737 = vmatpush1.bf16.xpose.msra.mxu0 %v716
        %738 = vmatprep.subr.bf16.mxu0 0
        %739 = vmatpush1.bf16.xpose.msra.mxu0 %v719
        %740 = vmatprep.subr.bf16.mxu0 0
        %741 = vmatpush1.bf16.xpose.msra.mxu0 %v722
        %742 = vmatprep.subr.bf16.mxu0 0
        %743 = vmatpush1.bf16.xpose.msra.mxu0 %v725
        %744 = vmatprep.subr.bf16.mxu0 0
        %745 = vmatpush1.bf16.xpose.msra.mxu0 %v728
        %746 = vmatprep.subr.bf16.mxu0 0
        %747 = vmatpush1.bf16.xpose.msra.mxu0 0
        %748 = vmatprep.subr.bf16.mxu0 0
        %749 = vmatpush1.bf16.xpose.msra.mxu0 0
        %750 = vmatprep.subr.bf16.mxu0 0
        %751 = vmatpush1.bf16.xpose.msra.mxu0 0
        %752 = vmatprep.subr.bf16.mxu0 0
        %753 = vmatpush1.bf16.xpose.msra.mxu0 0
        %754 = vmatprep.subr.bf16.mxu0 0
        %755 = vmatpush1.bf16.xpose.msra.mxu0 0
        %756 = vmatprep.subr.bf16.mxu0 0
        %757 = vmatpush1.bf16.xpose.msra.mxu0 0
        %758 = vmatprep.subr.bf16.mxu0 0
        %759 = vmatpush1.bf16.xpose.msra.mxu0 0
        %760 = vmatprep.subr.bf16.mxu0 0
        %761 = vmatpush1.bf16.xpose.msra.mxu0 0
        %762 = vmatprep.mubr.bf16.mxu0 0
        %763 = vmatmul.mubr.bf16.gmra.mrb[0].mxu0 %v683
        %v764 = vpop.f32.mrb[0].mxu0
        %v765 = vadd.f32 %v641, %v764
        %v766 = vpop.f32.mrb[0].mxu0
        %v767 = vpop.f32.mrb[0].mxu0
        %v768 = vadd.f32 %v642, %v767
        %v769 = vpop.f32.mrb[0].mxu0
        %770 = vmatprep.mubr.bf16.mxu0 0
        %771 = vmatmul.mubr.bf16.gmra.mrb[0].mxu0 %v686
        %v772 = vpop.f32.mrb[0].mxu0
        %v773 = vadd.f32 %v643, %v772
        %v774 = vpop.f32.mrb[0].mxu0
        %v775 = vpop.f32.mrb[0].mxu0
        %v776 = vadd.f32 %v644, %v775
        %v777 = vpop.f32.mrb[0].mxu0
        %778 = vmatprep.mubr.bf16.mxu0 0
        %779 = vmatmul.mubr.bf16.gmra.mrb[0].mxu0 %v689
        %v780 = vpop.f32.mrb[0].mxu0
        %v781 = vadd.f32 %v645, %v780
        %v782 = vpop.f32.mrb[0].mxu0
        %v783 = vpop.f32.mrb[0].mxu0
        %v784 = vadd.f32 %v646, %v783
        %v785 = vpop.f32.mrb[0].mxu0
        %786 = vmatprep.mubr.bf16.mxu0 0
        %787 = vmatmul.mubr.bf16.gmra.mrb[0].mxu0 %v692
        %v788 = vpop.f32.mrb[0].mxu0
        %v789 = vadd.f32 %v647, %v788
        %v790 = vpop.f32.mrb[0].mxu0
        %v791 = vpop.f32.mrb[0].mxu0
        %v792 = vadd.f32 %v648, %v791
        %v793 = vpop.f32.mrb[0].mxu0
        %794 = vmatprep.mubr.bf16.mxu0 0
        %795 = vmatmul.mubr.bf16.gmra.mrb[0].mxu0 %v695
        %v796 = vpop.f32.mrb[0].mxu0
        %v797 = vadd.f32 %v649, %v796
        %v798 = vpop.f32.mrb[0].mxu0
        %v799 = vpop.f32.mrb[0].mxu0
        %v800 = vadd.f32 %v650, %v799
        %v801 = vpop.f32.mrb[0].mxu0
        %802 = vmatprep.mubr.bf16.mxu0 0
        %803 = vmatmul.mubr.bf16.gmra.mrb[0].mxu0 %v698
        %v804 = vpop.f32.mrb[0].mxu0
        %v805 = vadd.f32 %v651, %v804
        %v806 = vpop.f32.mrb[0].mxu0
        %v807 = vpop.f32.mrb[0].mxu0
        %v808 = vadd.f32 %v652, %v807
        %v809 = vpop.f32.mrb[0].mxu0
        %810 = vmatprep.mubr.bf16.mxu0 0
        %811 = vmatmul.mubr.bf16.gmra.mrb[0].mxu0 %v701
        %v812 = vpop.f32.mrb[0].mxu0
        %v813 = vadd.f32 %v653, %v812
        %v814 = vpop.f32.mrb[0].mxu0
        %v815 = vpop.f32.mrb[0].mxu0
        %v816 = vadd.f32 %v654, %v815
        %v817 = vpop.f32.mrb[0].mxu0
        %818 = vmatprep.mubr.bf16.mxu0 0
        %819 = vmatmul.mubr.bf16.gmra.mrb[0].mxu0 %v704
        %v820 = vpop.f32.mrb[0].mxu0
        %v821 = vadd.f32 %v655, %v820
        %v822 = vpop.f32.mrb[0].mxu0
        %v823 = vpop.f32.mrb[0].mxu0
        %v824 = vadd.f32 %v656, %v823
        %v825 = vpop.f32.mrb[0].mxu0
        %826 = vdwg.mxu0
        %827 = vmax.xlane.f32.xlu0 %v765
        %v828 = vpop.xlane.xlu0 %827
        %829 = vmax.xlane.f32.xlu0 %v768
        %v830 = vpop.xlane.xlu0 %829
        %831 = vmax.xlane.f32.xlu0 %v773
        %v832 = vpop.xlane.xlu0 %831
        %833 = vmax.xlane.f32.xlu0 %v776
        %v834 = vpop.xlane.xlu0 %833
        %835 = vmax.xlane.f32.xlu0 %v781
        %v836 = vpop.xlane.xlu0 %835
        %837 = vmax.xlane.f32.xlu0 %v784
        %v838 = vpop.xlane.xlu0 %837
        %839 = vmax.xlane.f32.xlu0 %v789
        %v840 = vpop.xlane.xlu0 %839
        %841 = vmax.xlane.f32.xlu0 %v792
        %v842 = vpop.xlane.xlu0 %841
        %843 = vmax.xlane.f32.xlu0 %v797
        %v844 = vpop.xlane.xlu0 %843
        %845 = vmax.xlane.f32.xlu0 %v800
        %v846 = vpop.xlane.xlu0 %845
        %847 = vmax.xlane.f32.xlu0 %v805
        %v848 = vpop.xlane.xlu0 %847
        %849 = vmax.xlane.f32.xlu0 %v808
        %v850 = vpop.xlane.xlu0 %849
        %851 = vmax.xlane.f32.xlu0 %v813
        %v852 = vpop.xlane.xlu0 %851
        %853 = vmax.xlane.f32.xlu0 %v816
        %v854 = vpop.xlane.xlu0 %853
        %855 = vmax.xlane.f32.xlu0 %v821
        %v856 = vpop.xlane.xlu0 %855
        %857 = vmax.xlane.f32.xlu0 %v824
        %v858 = vpop.xlane.xlu0 %857
        %v859 = vsub.f32 %v765, %v828
        %v860 = vsub.f32 %v768, %v830
        %v861 = vsub.f32 %v773, %v832
        %v862 = vsub.f32 %v776, %v834
        %v863 = vsub.f32 %v781, %v836
        %v864 = vsub.f32 %v784, %v838
        %v865 = vsub.f32 %v789, %v840
        %v866 = vsub.f32 %v792, %v842
        %v867 = vsub.f32 %v797, %v844
        %v868 = vsub.f32 %v800, %v846
        %v869 = vsub.f32 %v805, %v848
        %v870 = vsub.f32 %v808, %v850
        %v871 = vsub.f32 %v813, %v852
        %v872 = vsub.f32 %v816, %v854
        %v873 = vsub.f32 %v821, %v856
        %v874 = vsub.f32 %v824, %v858
        %v875 = vmul.f32 %v859, 1.442695
        %v876 = vpow.pop %v875
        %v877 = vmul.f32 %v860, 1.442695
        %v878 = vpow.pop %v877
        %v879 = vmul.f32 %v861, 1.442695
        %v880 = vpow.pop %v879
        %v881 = vmul.f32 %v862, 1.442695
        %v882 = vpow.pop %v881
        %v883 = vmul.f32 %v863, 1.442695
        %v884 = vpow.pop %v883
        %v885 = vmul.f32 %v864, 1.442695
        %v886 = vpow.pop %v885
        %v887 = vmul.f32 %v865, 1.442695
        %v888 = vpow.pop %v887
        %v889 = vmul.f32 %v866, 1.442695
        %v890 = vpow.pop %v889
        %v891 = vmul.f32 %v867, 1.442695
        %v892 = vpow.pop %v891
        %v893 = vmul.f32 %v868, 1.442695
        %v894 = vpow.pop %v893
        %v895 = vmul.f32 %v869, 1.442695
        %v896 = vpow.pop %v895
        %v897 = vmul.f32 %v870, 1.442695
        %v898 = vpow.pop %v897
        %v899 = vmul.f32 %v871, 1.442695
        %v900 = vpow.pop %v899
        %v901 = vmul.f32 %v872, 1.442695
        %v902 = vpow.pop %v901
        %v903 = vmul.f32 %v873, 1.442695
        %v904 = vpow.pop %v903
        %v905 = vmul.f32 %v874, 1.442695
        %v906 = vpow.pop %v905
        %907 = vadd.xlane.f32.xlu0 %v876
        %v908 = vpop.xlane.xlu0 %907
        %909 = vadd.xlane.f32.xlu0 %v878
        %v910 = vpop.xlane.xlu0 %909
        %911 = vadd.xlane.f32.xlu0 %v880
        %v912 = vpop.xlane.xlu0 %911
        %913 = vadd.xlane.f32.xlu0 %v882
        %v914 = vpop.xlane.xlu0 %913
        %915 = vadd.xlane.f32.xlu0 %v884
        %v916 = vpop.xlane.xlu0 %915
        %917 = vadd.xlane.f32.xlu0 %v886
        %v918 = vpop.xlane.xlu0 %917
        %919 = vadd.xlane.f32.xlu0 %v888
        %v920 = vpop.xlane.xlu0 %919
        %921 = vadd.xlane.f32.xlu0 %v890
        %v922 = vpop.xlane.xlu0 %921
        %923 = vadd.xlane.f32.xlu0 %v892
        %v924 = vpop.xlane.xlu0 %923
        %925 = vadd.xlane.f32.xlu0 %v894
        %v926 = vpop.xlane.xlu0 %925
        %927 = vadd.xlane.f32.xlu0 %v896
        %v928 = vpop.xlane.xlu0 %927
        %929 = vadd.xlane.f32.xlu0 %v898
        %v930 = vpop.xlane.xlu0 %929
        %931 = vadd.xlane.f32.xlu0 %v900
        %v932 = vpop.xlane.xlu0 %931
        %933 = vadd.xlane.f32.xlu0 %v902
        %v934 = vpop.xlane.xlu0 %933
        %935 = vadd.xlane.f32.xlu0 %v904
        %v936 = vpop.xlane.xlu0 %935
        %937 = vadd.xlane.f32.xlu0 %v906
        %v938 = vpop.xlane.xlu0 %937
        %v939 = vrcp.pop %v908
        %v940 = vrcp.pop %v910
        %v941 = vrcp.pop %v912
        %v942 = vrcp.pop %v914
        %v943 = vrcp.pop %v916
        %v944 = vrcp.pop %v918
        %v945 = vrcp.pop %v920
        %v946 = vrcp.pop %v922
        %v947 = vrcp.pop %v924
        %v948 = vrcp.pop %v926
        %v949 = vrcp.pop %v928
        %v950 = vrcp.pop %v930
        %v951 = vrcp.pop %v932
        %v952 = vrcp.pop %v934
        %v953 = vrcp.pop %v936
        %v954 = vrcp.pop %v938
        %v955 = vmul.f32 %v876, %v939
        %v956 = vmul.f32 %v878, %v940
        %v957 = vmul.f32 %v880, %v941
        %v958 = vmul.f32 %v882, %v942
        %v959 = vmul.f32 %v884, %v943
        %v960 = vmul.f32 %v886, %v944
        %v961 = vmul.f32 %v888, %v945
        %v962 = vmul.f32 %v890, %v946
        %v963 = vmul.f32 %v892, %v947
        %v964 = vmul.f32 %v894, %v948
        %v965 = vmul.f32 %v896, %v949
        %v966 = vmul.f32 %v898, %v950
        %v967 = vmul.f32 %v900, %v951
        %v968 = vmul.f32 %v902, %v952
        %v969 = vmul.f32 %v904, %v953
        %v970 = vmul.f32 %v906, %v954
        %v971 = vpack.c.bf16 %v956, %v955
        %v972 = vpack.c.bf16 %v958, %v957
        %v973 = vpack.c.bf16 %v960, %v959
        %v974 = vpack.c.bf16 %v962, %v961
        %v975 = vpack.c.bf16 %v964, %v963
        %v976 = vpack.c.bf16 %v966, %v965
        %v977 = vpack.c.bf16 %v968, %v967
        %v978 = vpack.c.bf16 %v970, %v969
        %979 = vrot.lane.b32.xlu0 %v633, 64
        %v980 = vpop.permute.xlu0 %979
        %981 = vrot.lane.b32.xlu0 %v634, 64
        %v982 = vpop.permute.xlu0 %981
        %983 = vrot.lane.b32.xlu0 %v635, 64
        %v984 = vpop.permute.xlu0 %983
        %985 = vrot.lane.b32.xlu0 %v636, 64
        %v986 = vpop.permute.xlu0 %985
        %987 = vrot.lane.b32.xlu0 %v637, 64
        %v988 = vpop.permute.xlu0 %987
        %989 = vrot.lane.b32.xlu0 %v638, 64
        %v990 = vpop.permute.xlu0 %989
        %991 = vrot.lane.b32.xlu0 %v639, 64
        %v992 = vpop.permute.xlu0 %991
        %993 = vrot.lane.b32.xlu0 %v640, 64
        %v994 = vpop.permute.xlu0 %993
        %1003 = vmatprep.subr.bf16.mxu0 0
        %1004 = vmatpush1.bf16.msra.mxu0 %v980
        %1005 = vmatprep.subr.bf16.mxu0 0
        %1006 = vmatpush1.bf16.msra.mxu0 %v982
        %1007 = vmatprep.subr.bf16.mxu0 0
        %1008 = vmatpush1.bf16.msra.mxu0 %v984
        %1009 = vmatprep.subr.bf16.mxu0 0
        %1010 = vmatpush1.bf16.msra.mxu0 %v986
        %1011 = vmatprep.subr.bf16.mxu0 0
        %1012 = vmatpush1.bf16.msra.mxu0 %v988
        %1013 = vmatprep.subr.bf16.mxu0 0
        %1014 = vmatpush1.bf16.msra.mxu0 %v990
        %1015 = vmatprep.subr.bf16.mxu0 0
        %1016 = vmatpush1.bf16.msra.mxu0 %v992
        %1017 = vmatprep.subr.bf16.mxu0 0
        %1018 = vmatpush1.bf16.msra.mxu0 %v994
        %1019 = vmatprep.subr.bf16.mxu0 0
        %1020 = vmatpush1.bf16.msra.mxu0 0
        %1021 = vmatprep.subr.bf16.mxu0 0
        %1022 = vmatpush1.bf16.msra.mxu0 0
        %1023 = vmatprep.subr.bf16.mxu0 0
        %1024 = vmatpush1.bf16.msra.mxu0 0
        %1025 = vmatprep.subr.bf16.mxu0 0
        %1026 = vmatpush1.bf16.msra.mxu0 0
        %1027 = vmatprep.subr.bf16.mxu0 0
        %1028 = vmatpush1.bf16.msra.mxu0 0
        %1029 = vmatprep.subr.bf16.mxu0 0
        %1030 = vmatpush1.bf16.msra.mxu0 0
        %1031 = vmatprep.subr.bf16.mxu0 0
        %1032 = vmatpush1.bf16.msra.mxu0 0
        %1033 = vmatprep.subr.bf16.mxu0 0
        %1034 = vmatpush1.bf16.msra.mxu0 0
        %1035 = vmatprep.mubr.bf16.mxu0 0
        %1036 = vmatmul.mubr.bf16.gmra.mrb[0].mxu0 %v971
        %v1037 = vpop.f32.mrb[0].mxu0
        %v1038 = vadd.f32 0.0, %v1037
        %v1039 = vpop.f32.mrb[0].mxu0
        %v1040 = vpop.f32.mrb[0].mxu0
        %v1041 = vadd.f32 0.0, %v1040
        %v1042 = vpop.f32.mrb[0].mxu0
        %1043 = vmatprep.mubr.bf16.mxu0 0
        %1044 = vmatmul.mubr.bf16.gmra.mrb[0].mxu0 %v972
        %v1045 = vpop.f32.mrb[0].mxu0
        %v1046 = vadd.f32 0.0, %v1045
        %v1047 = vpop.f32.mrb[0].mxu0
        %v1048 = vpop.f32.mrb[0].mxu0
        %v1049 = vadd.f32 0.0, %v1048
        %v1050 = vpop.f32.mrb[0].mxu0
        %1051 = vmatprep.mubr.bf16.mxu0 0
        %1052 = vmatmul.mubr.bf16.gmra.mrb[0].mxu0 %v973
        %v1053 = vpop.f32.mrb[0].mxu0
        %v1054 = vadd.f32 0.0, %v1053
        %v1055 = vpop.f32.mrb[0].mxu0
        %v1056 = vpop.f32.mrb[0].mxu0
        %v1057 = vadd.f32 0.0, %v1056
        %v1058 = vpop.f32.mrb[0].mxu0
        %1059 = vmatprep.mubr.bf16.mxu0 0
        %1060 = vmatmul.mubr.bf16.gmra.mrb[0].mxu0 %v974
        %v1061 = vpop.f32.mrb[0].mxu0
        %v1062 = vadd.f32 0.0, %v1061
        %v1063 = vpop.f32.mrb[0].mxu0
        %v1064 = vpop.f32.mrb[0].mxu0
        %v1065 = vadd.f32 0.0, %v1064
        %v1066 = vpop.f32.mrb[0].mxu0
        %1067 = vmatprep.mubr.bf16.mxu0 0
        %1068 = vmatmul.mubr.bf16.gmra.mrb[0].mxu0 %v975
        %v1069 = vpop.f32.mrb[0].mxu0
        %v1070 = vadd.f32 0.0, %v1069
        %v1071 = vpop.f32.mrb[0].mxu0
        %v1072 = vpop.f32.mrb[0].mxu0
        %v1073 = vadd.f32 0.0, %v1072
        %v1074 = vpop.f32.mrb[0].mxu0
        %1075 = vmatprep.mubr.bf16.mxu0 0
        %1076 = vmatmul.mubr.bf16.gmra.mrb[0].mxu0 %v976
        %v1077 = vpop.f32.mrb[0].mxu0
        %v1078 = vadd.f32 0.0, %v1077
        %v1079 = vpop.f32.mrb[0].mxu0
        %v1080 = vpop.f32.mrb[0].mxu0
        %v1081 = vadd.f32 0.0, %v1080
        %v1082 = vpop.f32.mrb[0].mxu0
        %1083 = vmatprep.mubr.bf16.mxu0 0
        %1084 = vmatmul.mubr.bf16.gmra.mrb[0].mxu0 %v977
        %v1085 = vpop.f32.mrb[0].mxu0
        %v1086 = vadd.f32 0.0, %v1085
        %v1087 = vpop.f32.mrb[0].mxu0
        %v1088 = vpop.f32.mrb[0].mxu0
        %v1089 = vadd.f32 0.0, %v1088
        %v1090 = vpop.f32.mrb[0].mxu0
        %1091 = vmatprep.mubr.bf16.mxu0 0
        %1092 = vmatmul.mubr.bf16.gmra.mrb[0].mxu0 %v978
        %v1093 = vpop.f32.mrb[0].mxu0
        %v1094 = vadd.f32 0.0, %v1093
        %v1095 = vpop.f32.mrb[0].mxu0
        %v1096 = vpop.f32.mrb[0].mxu0
        %v1097 = vadd.f32 0.0, %v1096
        %v1098 = vpop.f32.mrb[0].mxu0
        %1099 = vdwg.mxu0
        %v1100 = vld [vmem:[#allocation2] sm:$0xff]
        %v1101 = vld [vmem:[#allocation2 + $0x8] sm:$0xff]
        %v1102 = vld [vmem:[#allocation2 + $0x10] sm:$0xff]
        %v1103 = vld [vmem:[#allocation2 + $0x18] sm:$0xff]
        %v1104 = vld [vmem:[#allocation2 + $0x20] sm:$0xff]
        %v1105 = vld [vmem:[#allocation2 + $0x28] sm:$0xff]
        %v1106 = vld [vmem:[#allocation2 + $0x30] sm:$0xff]
        %v1107 = vld [vmem:[#allocation2 + $0x38] sm:$0xff]
        %v1108 = vld [vmem:[#allocation2 + $0x40] sm:$0xff]
        %v1109 = vld [vmem:[#allocation2 + $0x48] sm:$0xff]
        %v1110 = vld [vmem:[#allocation2 + $0x50] sm:$0xff]
        %v1111 = vld [vmem:[#allocation2 + $0x58] sm:$0xff]
        %v1112 = vld [vmem:[#allocation2 + $0x60] sm:$0xff]
        %v1113 = vld [vmem:[#allocation2 + $0x68] sm:$0xff]
        %v1114 = vld [vmem:[#allocation2 + $0x70] sm:$0xff]
        %v1115 = vld [vmem:[#allocation2 + $0x78] sm:$0xff]
        %v1116 = vpack.c.bf16 %v1041, %v1038
        %v1117 = vpack.c.bf16 %v1049, %v1046
        %v1118 = vpack.c.bf16 %v1057, %v1054
        %v1119 = vpack.c.bf16 %v1065, %v1062
        %v1120 = vpack.c.bf16 %v1073, %v1070
        %v1121 = vpack.c.bf16 %v1081, %v1078
        %v1122 = vpack.c.bf16 %v1089, %v1086
        %v1123 = vpack.c.bf16 %v1097, %v1094
        %v1124 = vld [vmem:[%s288] sm:$0xf]
        %v1125 = vld [vmem:[%s288 + $0x4] sm:$0xf]
        %v1126 = vld [vmem:[%s288 + $0x8] sm:$0xf]
        %v1127 = vld [vmem:[%s288 + $0xc] sm:$0xf]
        %v1132 = vunpack.c.l.b16 %v1124
        %v1133 = vunpack.c.l.b16 %v1125
        %v1134 = vunpack.c.l.b16 %v1126
        %v1135 = vunpack.c.l.b16 %v1127
        %v1136 = vpack.c.b16 %v1133, %v1132
        %v1137 = vpack.c.b16 %v1135, %v1134
        %v1141 = vsel %vm681, %v1116, 0
        %v1144 = vsel %vm681, %v1117, 0
        %v1147 = vsel %vm681, %v1118, 0
        %v1150 = vsel %vm681, %v1119, 0
        %v1153 = vsel %vm681, %v1120, 0
        %v1156 = vsel %vm681, %v1121, 0
        %v1159 = vsel %vm681, %v1122, 0
        %v1162 = vsel %vm681, %v1123, 0
        %1164 = vmatprep.subr.bf16.mxu0 0
        %1165 = vmatpush1.bf16.msra.mxu0 %v1136
        %1166 = vmatprep.subr.bf16.mxu0 0
        %1167 = vmatpush1.bf16.msra.mxu0 %v1137
        %1168 = vmatprep.subr.bf16.mxu0 0
        %1169 = vmatpush1.bf16.msra.mxu0 0
        %1170 = vmatprep.subr.bf16.mxu0 0
        %1171 = vmatpush1.bf16.msra.mxu0 0
        %1172 = vmatprep.subr.bf16.mxu0 0
        %1173 = vmatpush1.bf16.msra.mxu0 0
        %1174 = vmatprep.subr.bf16.mxu0 0
        %1175 = vmatpush1.bf16.msra.mxu0 0
        %1176 = vmatprep.subr.bf16.mxu0 0
        %1177 = vmatpush1.bf16.msra.mxu0 0
        %1178 = vmatprep.subr.bf16.mxu0 0
        %1179 = vmatpush1.bf16.msra.mxu0 0
        %1180 = vmatprep.subr.bf16.mxu0 0
        %1181 = vmatpush1.bf16.msra.mxu0 0
        %1182 = vmatprep.subr.bf16.mxu0 0
        %1183 = vmatpush1.bf16.msra.mxu0 0
        %1184 = vmatprep.subr.bf16.mxu0 0
        %1185 = vmatpush1.bf16.msra.mxu0 0
        %1186 = vmatprep.subr.bf16.mxu0 0
        %1187 = vmatpush1.bf16.msra.mxu0 0
        %1188 = vmatprep.subr.bf16.mxu0 0
        %1189 = vmatpush1.bf16.msra.mxu0 0
        %1190 = vmatprep.subr.bf16.mxu0 0
        %1191 = vmatpush1.bf16.msra.mxu0 0
        %1192 = vmatprep.subr.bf16.mxu0 0
        %1193 = vmatpush1.bf16.msra.mxu0 0
        %1194 = vmatprep.subr.bf16.mxu0 0
        %1195 = vmatpush1.bf16.msra.mxu0 0
        %1196 = vmatprep.mubr.bf16.mxu0 0
        %1197 = vmatmul.mubr.bf16.gmra.mrb[0].mxu0 %v1141
        %v1198 = vpop.f32.mrb[0].mxu0
        %v1199 = vadd.f32 0.0, %v1198
        %v1200 = vpop.f32.mrb[0].mxu0
        %v1201 = vpop.f32.mrb[0].mxu0
        %v1202 = vadd.f32 0.0, %v1201
        %v1203 = vpop.f32.mrb[0].mxu0
        %1204 = vmatprep.mubr.bf16.mxu0 0
        %1205 = vmatmul.mubr.bf16.gmra.mrb[0].mxu0 %v1144
        %v1206 = vpop.f32.mrb[0].mxu0
        %v1207 = vadd.f32 0.0, %v1206
        %v1208 = vpop.f32.mrb[0].mxu0
        %v1209 = vpop.f32.mrb[0].mxu0
        %v1210 = vadd.f32 0.0, %v1209
        %v1211 = vpop.f32.mrb[0].mxu0
        %1212 = vmatprep.mubr.bf16.mxu0 0
        %1213 = vmatmul.mubr.bf16.gmra.mrb[0].mxu0 %v1147
        %v1214 = vpop.f32.mrb[0].mxu0
        %v1215 = vadd.f32 0.0, %v1214
        %v1216 = vpop.f32.mrb[0].mxu0
        %v1217 = vpop.f32.mrb[0].mxu0
        %v1218 = vadd.f32 0.0, %v1217
        %v1219 = vpop.f32.mrb[0].mxu0
        %1220 = vmatprep.mubr.bf16.mxu0 0
        %1221 = vmatmul.mubr.bf16.gmra.mrb[0].mxu0 %v1150
        %v1222 = vpop.f32.mrb[0].mxu0
        %v1223 = vadd.f32 0.0, %v1222
        %v1224 = vpop.f32.mrb[0].mxu0
        %v1225 = vpop.f32.mrb[0].mxu0
        %v1226 = vadd.f32 0.0, %v1225
        %v1227 = vpop.f32.mrb[0].mxu0
        %1228 = vmatprep.mubr.bf16.mxu0 0
        %1229 = vmatmul.mubr.bf16.gmra.mrb[0].mxu0 %v1153
        %v1230 = vpop.f32.mrb[0].mxu0
        %v1231 = vadd.f32 0.0, %v1230
        %v1232 = vpop.f32.mrb[0].mxu0
        %v1233 = vpop.f32.mrb[0].mxu0
        %v1234 = vadd.f32 0.0, %v1233
        %v1235 = vpop.f32.mrb[0].mxu0
        %1236 = vmatprep.mubr.bf16.mxu0 0
        %1237 = vmatmul.mubr.bf16.gmra.mrb[0].mxu0 %v1156
        %v1238 = vpop.f32.mrb[0].mxu0
        %v1239 = vadd.f32 0.0, %v1238
        %v1240 = vpop.f32.mrb[0].mxu0
        %v1241 = vpop.f32.mrb[0].mxu0
        %v1242 = vadd.f32 0.0, %v1241
        %v1243 = vpop.f32.mrb[0].mxu0
        %1244 = vmatprep.mubr.bf16.mxu0 0
        %1245 = vmatmul.mubr.bf16.gmra.mrb[0].mxu0 %v1159
        %v1246 = vpop.f32.mrb[0].mxu0
        %v1247 = vadd.f32 0.0, %v1246
        %v1248 = vpop.f32.mrb[0].mxu0
        %v1249 = vpop.f32.mrb[0].mxu0
        %v1250 = vadd.f32 0.0, %v1249
        %v1251 = vpop.f32.mrb[0].mxu0
        %1252 = vmatprep.mubr.bf16.mxu0 0
        %1253 = vmatmul.mubr.bf16.gmra.mrb[0].mxu0 %v1162
        %v1254 = vpop.f32.mrb[0].mxu0
        %v1255 = vadd.f32 0.0, %v1254
        %v1256 = vpop.f32.mrb[0].mxu0
        %v1257 = vpop.f32.mrb[0].mxu0
        %v1258 = vadd.f32 0.0, %v1257
        %v1259 = vpop.f32.mrb[0].mxu0
        %1260 = vdwg.mxu0
        %v1261 = vadd.f32 %v1100, %v1199
        %v1262 = vadd.f32 %v1101, %v1202
        %v1263 = vadd.f32 %v1102, %v1207
        %v1264 = vadd.f32 %v1103, %v1210
        %v1265 = vadd.f32 %v1104, %v1215
        %v1266 = vadd.f32 %v1105, %v1218
        %v1267 = vadd.f32 %v1106, %v1223
        %v1268 = vadd.f32 %v1107, %v1226
        %v1269 = vadd.f32 %v1108, %v1231
        %v1270 = vadd.f32 %v1109, %v1234
        %v1271 = vadd.f32 %v1110, %v1239
        %v1272 = vadd.f32 %v1111, %v1242
        %v1273 = vadd.f32 %v1112, %v1247
        %v1274 = vadd.f32 %v1113, %v1250
        %v1275 = vadd.f32 %v1114, %v1255
        %v1276 = vadd.f32 %v1115, %v1258
        %1277 = vst [vmem:[#allocation2] sm:$0xff] %v1261
        %1278 = vst [vmem:[#allocation2 + $0x8] sm:$0xff] %v1262
        %1279 = vst [vmem:[#allocation2 + $0x10] sm:$0xff] %v1263
        %1280 = vst [vmem:[#allocation2 + $0x18] sm:$0xff] %v1264
        %1281 = vst [vmem:[#allocation2 + $0x20] sm:$0xff] %v1265
        %1282 = vst [vmem:[#allocation2 + $0x28] sm:$0xff] %v1266
        %1283 = vst [vmem:[#allocation2 + $0x30] sm:$0xff] %v1267
        %1284 = vst [vmem:[#allocation2 + $0x38] sm:$0xff] %v1268
        %1285 = vst [vmem:[#allocation2 + $0x40] sm:$0xff] %v1269
        %1286 = vst [vmem:[#allocation2 + $0x48] sm:$0xff] %v1270
        %1287 = vst [vmem:[#allocation2 + $0x50] sm:$0xff] %v1271
        %1288 = vst [vmem:[#allocation2 + $0x58] sm:$0xff] %v1272
        %1289 = vst [vmem:[#allocation2 + $0x60] sm:$0xff] %v1273
        %1290 = vst [vmem:[#allocation2 + $0x68] sm:$0xff] %v1274
        %1291 = vst [vmem:[#allocation2 + $0x70] sm:$0xff] %v1275
        %1292 = vst [vmem:[#allocation2 + $0x78] sm:$0xff] %v1276
        %p1293 = scmp.eq.s32.totalorder %s24, 3
        // Predicated region
        $region45: #{causal_self_attention.1} parent=39 // pred_check
          %p1294 = pneg %p1293
        $region46: #{causal_self_attention.1} parent=39 // pred_check_branch
          %1296 = sbr.rel (%p1294) target = $region48
        $region47: #{causal_self_attention.1} parent=39 // pred_region
          %v1297 = vld [vmem:[#allocation2] sm:$0xff]
          %v1298 = vld [vmem:[#allocation2 + $0x8] sm:$0xff]
          %v1299 = vld [vmem:[#allocation2 + $0x10] sm:$0xff]
          %v1300 = vld [vmem:[#allocation2 + $0x18] sm:$0xff]
          %v1301 = vld [vmem:[#allocation2 + $0x20] sm:$0xff]
          %v1302 = vld [vmem:[#allocation2 + $0x28] sm:$0xff]
          %v1303 = vld [vmem:[#allocation2 + $0x30] sm:$0xff]
          %v1304 = vld [vmem:[#allocation2 + $0x38] sm:$0xff]
          %v1305 = vld [vmem:[#allocation2 + $0x40] sm:$0xff]
          %v1306 = vld [vmem:[#allocation2 + $0x48] sm:$0xff]
          %v1307 = vld [vmem:[#allocation2 + $0x50] sm:$0xff]
          %v1308 = vld [vmem:[#allocation2 + $0x58] sm:$0xff]
          %v1309 = vld [vmem:[#allocation2 + $0x60] sm:$0xff]
          %v1310 = vld [vmem:[#allocation2 + $0x68] sm:$0xff]
          %v1311 = vld [vmem:[#allocation2 + $0x70] sm:$0xff]
          %v1312 = vld [vmem:[#allocation2 + $0x78] sm:$0xff]
          %v1313 = vld [vmem:[%s4] sm:$0x1]
          %v1315 = vlaneseq
          %v1316 = vshrl.u32 %v1315, 7
          %v1317 = vsub.s32 0, %v1316
          %v1318 = vrot.slane %v1313, %v1317
          %v1320 = vadd.f32 %v1297, %v1318
          %v1321 = vadd.f32 %v1298, %v1318
          %v1322 = vadd.f32 %v1299, %v1318
          %v1323 = vadd.f32 %v1300, %v1318
          %v1324 = vadd.f32 %v1301, %v1318
          %v1325 = vadd.f32 %v1302, %v1318
          %v1326 = vadd.f32 %v1303, %v1318
          %v1327 = vadd.f32 %v1304, %v1318
          %v1328 = vadd.f32 %v1305, %v1318
          %v1329 = vadd.f32 %v1306, %v1318
          %v1330 = vadd.f32 %v1307, %v1318
          %v1331 = vadd.f32 %v1308, %v1318
          %v1332 = vadd.f32 %v1309, %v1318
          %v1333 = vadd.f32 %v1310, %v1318
          %v1334 = vadd.f32 %v1311, %v1318
          %v1335 = vadd.f32 %v1312, %v1318
          %1336 = vst [vmem:[%s270] sm:$0xff] %v1320
          %1337 = vst [vmem:[%s270 + $0x8] sm:$0xff] %v1321
          %1338 = vst [vmem:[%s270 + $0x10] sm:$0xff] %v1322
          %1339 = vst [vmem:[%s270 + $0x18] sm:$0xff] %v1323
          %1340 = vst [vmem:[%s270 + $0x20] sm:$0xff] %v1324
          %1341 = vst [vmem:[%s270 + $0x28] sm:$0xff] %v1325
          %1342 = vst [vmem:[%s270 + $0x30] sm:$0xff] %v1326
          %1343 = vst [vmem:[%s270 + $0x38] sm:$0xff] %v1327
          %1344 = vst [vmem:[%s270 + $0x40] sm:$0xff] %v1328
          %1345 = vst [vmem:[%s270 + $0x48] sm:$0xff] %v1329
          %1346 = vst [vmem:[%s270 + $0x50] sm:$0xff] %v1330
          %1347 = vst [vmem:[%s270 + $0x58] sm:$0xff] %v1331
          %1348 = vst [vmem:[%s270 + $0x60] sm:$0xff] %v1332
          %1349 = vst [vmem:[%s270 + $0x68] sm:$0xff] %v1333
          %1350 = vst [vmem:[%s270 + $0x70] sm:$0xff] %v1334
          %1351 = vst [vmem:[%s270 + $0x78] sm:$0xff] %v1335
        $region48: #{causal_self_attention.1} parent=39 // pred_fallthru
          _
        %s1352 = sand.u32 %s164, 1
        %s1353 = scalar_lea.sflag [#allocation5], %s1352
        %s1354 = sand.u32 %s164, 1
        %s1355 = smul.addr %s1354, 128
        %s1356 = scalar_lea.vmem [#allocation4], %s1355
        // Predicated region
        $region49: #{causal_self_attention.1} parent=39 // pred_check
          %p1357 = pneg %p174
        $region50: #{causal_self_attention.1} parent=39 // pred_check_branch
          %1359 = sbr.rel (%p1357) target = $region52
        $region51: #{causal_self_attention.1} parent=39 // pred_region
          %s1361 = ssub.s32 2048, 2048
          %1362 = vsyncadd %s1353, %s1361
          %s1363 = smul.addr %s23, 16
          %s1364 = smul.addr %s1363, 128
          %s1365 = scalar_lea.hbm %s5, %s1364
          %s1366 = sshll.u32 %s1356, 4
          %s1367 = int_to_ptr.vmem [resolvable:$true] %s1366
          %1372 = dma.vmem_to_hbm [thread:$0]  %s1367, 2048, %s1365, %s1353, 128, 128, 8
        $region52: #{causal_self_attention.1} parent=39 // pred_fallthru
          _
      $region40: #{causal_self_attention.1} parent=5 // pred_fallthru
        _
      %p1373 = scmp.le.s32.totalorder 2, %s14
      // Predicated region
      $region53: #{causal_self_attention.1} parent=5 // pred_check
        %p1374 = pneg %p1373
      $region54: #{causal_self_attention.1} parent=5 // pred_check_branch
        %1376 = sbr.rel (%p1374) target = $region56
      $region55: #{causal_self_attention.1} parent=5 // pred_region
        %s1377 = ssub.s32 %s14, 2
        // Predicated region
        $region57: #{causal_self_attention.1} parent=55 // pred_check
          %p1378 = pneg %p180
        $region58: #{causal_self_attention.1} parent=55 // pred_check_branch
          %1380 = sbr.rel (%p1378) target = $region60
        $region59: #{causal_self_attention.1} parent=55 // pred_region
          %s1381 = sand.u32 %s165, 1
          %s1382 = scalar_lea.sflag [#allocation5], %s1381
          %s1383 = sand.u32 %s165, 1
          %s1384 = smul.addr %s1383, 128
          %s1385 = scalar_lea.vmem [#allocation4], %s1384
          %1386 = dma.done %s1382, 2048
        $region60: #{causal_self_attention.1} parent=55 // pred_fallthru
          _
      $region56: #{causal_self_attention.1} parent=5 // pred_fallthru
        _
    $region6: #{causal_self_attention.1} parent=1 // loop_footer
      %s18 = sadd.s32 1, %s14
    $region7: #{causal_self_attention.1} parent=1 // loop_footer_branch
      %13 = sbr.rel target = $region3
    $region8: #{causal_self_attention.1} parent=1 // loop_exit
      _
    %1387 = vsyncpa [#allocation5], 1
    %s1388 = scalar_lea.sflag [#allocation5], 1
    %1389 = vsyncpa %s1388, 1

</llo_original>
